<compile_context>
chip_gen: v7x
topology: tpu7x:2x2x1
jax: 0.10.0
libtpu: 0.0.40
codegen_flags: <defaults>
</compile_context>

<pallas_src>
import jax
import jax.numpy as jnp
import numpy as np
from jax.experimental import pallas as pl
from jax.experimental.pallas import tpu as pltpu

INPUT_SIZE = 784
HIDDEN_SIZE = 500
NUM_CLASSES = 10

HIDDEN_PAD = 512   # 500 -> 512 (multiple of 128): clean vreg tiling for h / w1 / w2
OUT_PAD = 128      # 10  -> 128: lane-dense output, unmasked stores


def _round_up(x, m):
    return ((x + m - 1) // m) * m


def _cdiv(a, b):
    return -(-a // b)


def mlp_kernel(x_ref, w1_ref, b1_ref, w2_ref, b2_ref, o_ref):
    # x arrives f32 (one 4 B/elem read from HBM); cast to bf16 here — the cast is VPU
    # filler that hides under the MXU-bound fc1 matmul.
    x_bf16 = x_ref[...].astype(jnp.bfloat16)
    # fc1: (tb, 784)bf16 @ (784, 512)bf16 -> f32 accumulation on the MXU
    h = jnp.dot(x_bf16, w1_ref[...], preferred_element_type=jnp.float32)
    # bias + ReLU on full 512-wide (unmasked) vregs
    h = jnp.maximum(h + b1_ref[...], 0.0)
    # fc2: (tb, 512)bf16 @ (512, 128)bf16 -> f32 accumulation
    out = jnp.dot(h.astype(jnp.bfloat16), w2_ref[...],
                  preferred_element_type=jnp.float32)
    # bias add, then lane-dense 128-wide bf16 store (valid classes = first 10 columns)
    o_ref[...] = (out + b2_ref[...]).astype(o_ref.dtype)


def prepare_params(w1, b1, w2, b2):
    """One-time (model-load) padding + bf16 cast of the parameters.

    Zero-padding is mathematically inert: padded hidden units have zero weight + zero
    bias -> ReLU(0) = 0 -> no contribution to fc2; padded output columns are zero and
    sliced off by the wrapper.
    """
    b1 = jnp.reshape(b1, (1, -1))
    b2 = jnp.reshape(b2, (1, -1))
    w1p = jnp.zeros((INPUT_SIZE, HIDDEN_PAD), jnp.bfloat16)
    w1p = w1p.at[:, :HIDDEN_SIZE].set(w1.astype(jnp.bfloat16))
    b1p = jnp.zeros((1, HIDDEN_PAD), jnp.float32)
    b1p = b1p.at[:, :HIDDEN_SIZE].set(b1.astype(jnp.float32))
    w2p = jnp.zeros((HIDDEN_PAD, OUT_PAD), jnp.bfloat16)
    w2p = w2p.at[:HIDDEN_SIZE, :NUM_CLASSES].set(w2.astype(jnp.bfloat16))
    b2p = jnp.zeros((1, OUT_PAD), jnp.float32)
    b2p = b2p.at[:, :NUM_CLASSES].set(b2.astype(jnp.float32))
    return w1p, b1p, w2p, b2p


def neural_net_forward(x, params, *, tb=512):
    """Forward pass of NerualNet.

    x:      (B, 784) float32
    params: output of prepare_params() — padded bf16 weights / f32 biases
    Returns (B, 10) float32.
    """
    w1p, b1p, w2p, b2p = params
    B = x.shape[0]

    # --- balanced batch tiling ---------------------------------------------------
    # n_tiles = number of grid steps. Guarantee >= 2 (and an even count) whenever B
    # allows, so the "parallel" grid axis shards evenly across the two v7x TensorCores.
    # tb_eff is then chosen so tiles are balanced (tail waste < 8 rows) rather than
    # padding B up to a fixed multiple of tb.
    n_tiles = max(1, _cdiv(B, tb))
    if B >= 16:
        n_tiles = max(n_tiles, 2)
    if n_tiles > 1 and (n_tiles % 2) == 1:
        n_tiles += 1
    tb_eff = max(8, _round_up(_cdiv(B, n_tiles), 8))
    B_pad = n_tiles * tb_eff

    xp = x
    if B_pad != B:
        xp = jnp.zeros((B_pad, INPUT_SIZE), x.dtype).at[:B].set(x)

    flops = 2 * B_pad * (INPUT_SIZE * HIDDEN_PAD + HIDDEN_PAD * OUT_PAD)
    bytes_accessed = (
        B_pad * INPUT_SIZE * 4                      # x (f32 in)
        + B_pad * OUT_PAD * 2                       # out (bf16)
        + INPUT_SIZE * HIDDEN_PAD * 2 + HIDDEN_PAD * 4   # w1 + b1
        + HIDDEN_PAD * OUT_PAD * 2 + OUT_PAD * 4         # w2 + b2
    )

    out_padded = pl.pallas_call(
        mlp_kernel,
        out_shape=jax.ShapeDtypeStruct((B_pad, OUT_PAD), jnp.bfloat16),
        grid_spec=pltpu.PrefetchScalarGridSpec(
            num_scalar_prefetch=0,
            grid=(n_tiles,),
            in_specs=[
                pl.BlockSpec((tb_eff, INPUT_SIZE), lambda i: (i, 0)),     # x (f32)
                pl.BlockSpec((INPUT_SIZE, HIDDEN_PAD), lambda i: (0, 0)),  # w1 (bf16)
                pl.BlockSpec((1, HIDDEN_PAD), lambda i: (0, 0)),           # b1 (f32)
                pl.BlockSpec((HIDDEN_PAD, OUT_PAD), lambda i: (0, 0)),     # w2 (bf16)
                pl.BlockSpec((1, OUT_PAD), lambda i: (0, 0)),              # b2 (f32)
            ],
            out_specs=pl.BlockSpec((tb_eff, OUT_PAD), lambda i: (i, 0)),
        ),
        compiler_params=pltpu.CompilerParams(
            dimension_semantics=("parallel",),
            # tb=512: ~2x1.6MB x + ~2x0.13MB out + ~1.9MB weights << 32 MiB,
            # safe on v5e/v6e/v7x scoped VMEM.
            vmem_limit_bytes=32 * 1024 * 1024,
        ),
        cost_estimate=pl.CostEstimate(
            flops=flops, transcendentals=0, bytes_accessed=bytes_accessed),
    )(xp, w1p, b1p, w2p, b2p)

    # Slice off batch/class padding and upcast the bf16 writeback to f32.
    return out_padded[:B, :NUM_CLASSES].astype(jnp.float32)


def init_params(key):
    # Deterministic init mimicking nn.Linear's uniform(-1/sqrt(fan_in), 1/sqrt(fan_in))
    k1, k2, k3, k4 = jax.random.split(key, 4)
    bound1 = 1.0 / np.sqrt(INPUT_SIZE)
    bound2 = 1.0 / np.sqrt(HIDDEN_SIZE)
    w1 = jax.random.uniform(k1, (INPUT_SIZE, HIDDEN_SIZE), jnp.float32, -bound1, bound1)
    b1 = jax.random.uniform(k2, (1, HIDDEN_SIZE), jnp.float32, -bound1, bound1)
    w2 = jax.random.uniform(k3, (HIDDEN_SIZE, NUM_CLASSES), jnp.float32, -bound2, bound2)
    b2 = jax.random.uniform(k4, (1, NUM_CLASSES), jnp.float32, -bound2, bound2)
    return w1, b1, w2, b2


if __name__ == "__main__":
    key = jax.random.PRNGKey(0)
    kx, kp = jax.random.split(key)

    B = 16  # small batch for the smoke test (wrapper scales tiling up at realistic B)
    x = jax.random.normal(kx, (B, INPUT_SIZE), jnp.float32)
    w1, b1, w2, b2 = init_params(kp)

    # One-time parameter preparation (padding + bf16 cast) — hoisted out of the forward.
    params = prepare_params(w1, b1, w2, b2)
    params = jax.tree_util.tree_map(jax.block_until_ready, params)

    out = neural_net_forward(x, params)
    out = jax.block_until_ready(out)

    # Reference in plain JAX (f32). Kernel uses bf16 MXU operands, f32 accumulation and a
    # bf16 output writeback, so the tolerance is relaxed accordingly.
    ref = jnp.maximum(x @ w1 + b1, 0.0) @ w2 + b2
    np.testing.assert_allclose(np.asarray(out), np.asarray(ref), rtol=3e-2, atol=3e-2)

    assert out.shape == (B, NUM_CLASSES)
    print("KERNEL_OK")
</pallas_src>

<mosaic_0001>
module attributes {stable_mosaic.version = 11 : i64} {
  func.func @mlp_kernel(%arg0: i32, %arg1: memref<8x784xf32, #tpu.memory_space<vmem>>, %arg2: memref<784x512xbf16, #tpu.memory_space<vmem>>, %arg3: memref<1x512xf32, #tpu.memory_space<vmem>>, %arg4: memref<512x128xbf16, #tpu.memory_space<vmem>>, %arg5: memref<1x128xf32, #tpu.memory_space<vmem>>, %arg6: memref<8x128xbf16, #tpu.memory_space<vmem>>) attributes {dimension_semantics = [#tpu.dimension_semantics<parallel>], iteration_bounds = array<i64: 2>, scalar_prefetch = 0 : i64, scratch_operands = 0 : i64, tpu.core_type = #tpu.core_type<tc>, window_params = [{transform_indices = @transform_0, window_bounds = array<i64: 8, 784>}, {pipeline_mode = #tpu.pipeline_mode<synchronous>, transform_indices = @transform_1, window_bounds = array<i64: 784, 512>}, {pipeline_mode = #tpu.pipeline_mode<synchronous>, transform_indices = @transform_2, window_bounds = array<i64: 1, 512>}, {pipeline_mode = #tpu.pipeline_mode<synchronous>, transform_indices = @transform_3, window_bounds = array<i64: 512, 128>}, {pipeline_mode = #tpu.pipeline_mode<synchronous>, transform_indices = @transform_4, window_bounds = array<i64: 1, 128>}, {transform_indices = @transform_5, window_bounds = array<i64: 8, 128>}]} {
    %c0 = arith.constant 0 : index
    %c0_0 = arith.constant 0 : index
    %0 = vector.load %arg1[%c0, %c0_0] : memref<8x784xf32, #tpu.memory_space<vmem>>, vector<8x784xf32>
    %1 = arith.truncf %0 : vector<8x784xf32> to vector<8x784xbf16>
    %c0_1 = arith.constant 0 : index
    %c0_2 = arith.constant 0 : index
    %2 = vector.load %arg2[%c0_1, %c0_2] : memref<784x512xbf16, #tpu.memory_space<vmem>>, vector<784x512xbf16>
    %cst = arith.constant dense<0.000000e+00> : vector<8x512xf32>
    %3 = tpu.matmul %1, %2, %cst {dimension_numbers = #tpu.dot_dimension_numbers<[1], [0], [0], [1], [0, 0, 1, 1], [], []>} : vector<8x784xbf16>, vector<784x512xbf16>, vector<8x512xf32> -> vector<8x512xf32>
    %c0_3 = arith.constant 0 : index
    %c0_4 = arith.constant 0 : index
    %4 = vector.load %arg3[%c0_3, %c0_4] : memref<1x512xf32, #tpu.memory_space<vmem>>, vector<1x512xf32>
    %5 = vector.broadcast %4 : vector<1x512xf32> to vector<8x512xf32>
    %6 = arith.addf %3, %5 : vector<8x512xf32>
    %cst_5 = arith.constant 0.000000e+00 : f32
    %7 = vector.broadcast %cst_5 : f32 to vector<8x512xf32>
    %8 = arith.maximumf %6, %7 : vector<8x512xf32>
    %9 = arith.truncf %8 : vector<8x512xf32> to vector<8x512xbf16>
    %c0_6 = arith.constant 0 : index
    %c0_7 = arith.constant 0 : index
    %10 = vector.load %arg4[%c0_6, %c0_7] : memref<512x128xbf16, #tpu.memory_space<vmem>>, vector<512x128xbf16>
    %cst_8 = arith.constant dense<0.000000e+00> : vector<8x128xf32>
    %11 = tpu.matmul %9, %10, %cst_8 {dimension_numbers = #tpu.dot_dimension_numbers<[1], [0], [0], [1], [0, 0, 1, 1], [], []>} : vector<8x512xbf16>, vector<512x128xbf16>, vector<8x128xf32> -> vector<8x128xf32>
    %c0_9 = arith.constant 0 : index
    %c0_10 = arith.constant 0 : index
    %12 = vector.load %arg5[%c0_9, %c0_10] : memref<1x128xf32, #tpu.memory_space<vmem>>, vector<1x128xf32>
    %13 = vector.broadcast %12 : vector<1x128xf32> to vector<8x128xf32>
    %14 = arith.addf %11, %13 : vector<8x128xf32>
    %15 = arith.truncf %14 : vector<8x128xf32> to vector<8x128xbf16>
    %c0_11 = arith.constant 0 : index
    %c0_12 = arith.constant 0 : index
    %16 = vector.load %arg6[%c0_11, %c0_12] : memref<8x128xbf16, #tpu.memory_space<vmem>>, vector<8x128xbf16>
    tpu.vector_store %arg6[%c0_11, %c0_12], %15 {strides = array<i32>} : memref<8x128xbf16, #tpu.memory_space<vmem>>, vector<8x128xbf16>,
    return
  }
  func.func @transform_0(%arg0: i32) -> (i32, i32) {
    %c0_i32 = arith.constant 0 : i32
    %c0_i32_0 = arith.constant 0 : i32
    return %arg0, %c0_i32 : i32, i32
  }
  func.func @transform_1(%arg0: i32) -> (i32, i32) {
    %c0_i32 = arith.constant 0 : i32
    %c0_i32_0 = arith.constant 0 : i32
    %c0_i32_1 = arith.constant 0 : i32
    return %c0_i32, %c0_i32_0 : i32, i32
  }
  func.func @transform_2(%arg0: i32) -> (i32, i32) {
    %c0_i32 = arith.constant 0 : i32
    %c0_i32_0 = arith.constant 0 : i32
    %c0_i32_1 = arith.constant 0 : i32
    return %c0_i32, %c0_i32_0 : i32, i32
  }
  func.func @transform_3(%arg0: i32) -> (i32, i32) {
    %c0_i32 = arith.constant 0 : i32
    %c0_i32_0 = arith.constant 0 : i32
    %c0_i32_1 = arith.constant 0 : i32
    return %c0_i32, %c0_i32_0 : i32, i32
  }
  func.func @transform_4(%arg0: i32) -> (i32, i32) {
    %c0_i32 = arith.constant 0 : i32
    %c0_i32_0 = arith.constant 0 : i32
    %c0_i32_1 = arith.constant 0 : i32
    return %c0_i32, %c0_i32_0 : i32, i32
  }
  func.func @transform_5(%arg0: i32) -> (i32, i32) {
    %c0_i32 = arith.constant 0 : i32
    %c0_i32_0 = arith.constant 0 : i32
    return %arg0, %c0_i32 : i32, i32
  }
}

</mosaic_0001>

<llo_original>
// kernel: tpu_custom_call.1
$region0: #{tpu_custom_call.1}
  #allocation0 [shape = 'u32[]', space=smem, size = 0x4, offset = 0x4, fixed_abs, tag = 'smem constant byte address 0x4 - core index']
  #allocation1 [shape = 'u32[144,128]{1,0:T(1,128)}', space=vmem, size = 0x12000, scoped, tag = 'internal scratch']
  %s0 = inlined_call_operand.hbm [shape: f32[16,784], index: 0, kind: input, shape index: {}]
  %s1 = inlined_call_operand.hbm [shape: bf16[784,512], index: 1, kind: input, shape index: {}]
  %s2 = inlined_call_operand.vmem [shape: f32[1,512], index: 2, kind: input, shape index: {}]
  %s3 = inlined_call_operand.hbm [shape: bf16[512,128], index: 3, kind: input, shape index: {}]
  %s4 = inlined_call_operand.vmem [shape: f32[1,128], index: 4, kind: input, shape index: {}]
  %s5 = inlined_call_operand.hbm [shape: bf16[16,128], index: 5, kind: output, shape index: {}]
  %s6 = sld [smem:[#allocation0]]
  $region65: #{tpu_custom_call.1} parent=0
    _
  %s8 = ssub.s32 1, %s6
  %s9 = scalar_select 0, %s8, %s6
  $region1: #{tpu_custom_call.1} parent=0
    #allocation2 [shape = 'u8[57344]{0}', space=vmem, size = 0xe000, scoped, tag = 'input window, operand 0']
    #allocation3 [shape = 's32[2]{0}', space=sflag, size = 0x8, scoped, tag = 'scoped memory for tpu_custom_call.1']
    #allocation4 [shape = 's32[2]{0}', space=sflag, size = 0x8, scoped, tag = 'scoped memory for tpu_custom_call.1']
    #allocation5 [shape = 'u8[802816]{0}', space=vmem, size = 0xc4000, scoped, tag = 'input window, operand 1, single buffered']
    #allocation6 [shape = 's32[1]{0}', space=sflag, size = 0x4, scoped, tag = 'scoped memory for tpu_custom_call.1']
    #allocation7 [shape = 'u8[131072]{0}', space=vmem, size = 0x20000, scoped, tag = 'input window, operand 3, single buffered']
    #allocation8 [shape = 'u8[4096]{0}', space=vmem, size = 0x1000, scoped, tag = 'output window, operand 0']
    %10 = vsyncpa [#allocation3], 0
    %s11 = scalar_lea.sflag [#allocation3], 1
    %12 = vsyncpa %s11, 0
    %13 = vsyncpa [#allocation6], 0
    %14 = vsyncpa [#allocation4], 0
    %s15 = scalar_lea.sflag [#allocation4], 1
    %16 = vsyncpa %s15, 0
    loop: start=0, step=1, limit=4
    $region2: #{tpu_custom_call.1} parent=1 // loop_pre_header
      _
    $region3: #{tpu_custom_call.1} parent=1 // loop_header
      %s18 = sphi 0, %s22
      %p19 = scmp.ge.s32.totalorder %s18, 4
      %s28 = sphi 0, %s30
      %s31 = sphi 0, %s28
      %s32 = sphi 0, %s31
      %s48 = sphi 0, %s32
      %s52 = sphi 0, %s52
      %s54 = sphi 0, %s52
      %s55 = sphi 0, %s54
      %s69 = sphi 0, %s55
      %s73 = sphi 0, %s73
      %s75 = sphi 0, %s73
      %s76 = sphi 0, %s75
      %s90 = sphi 0, %s76
      %s94 = sphi 0, %s94
      %s96 = sphi 0, %s94
      %s97 = sphi 0, %s96
      %s111 = sphi 0, %s97
      %s115 = sphi 0, %s115
      %s117 = sphi 0, %s115
      %s118 = sphi 0, %s117
      %s132 = sphi 0, %s118
      %s138 = sphi 0, %s140
      %s141 = sphi 0, %s138
      %s142 = sphi 0, %s141
      %s158 = sphi 0, %s142
    $region4: #{tpu_custom_call.1} parent=1 // loop_header_branch
      %21 = sbr.rel (%p19) target = $region8
    $region5: #{tpu_custom_call.1} parent=1 // loop_body
      %s23 = ssub.s32 %s18, 1
      %s24 = ssub.s32 %s18, 2
      %s25 = sadd.s32 %s18, 1
      %s26 = ssub.s32 %s18, %s25
      %p27 = scmp.eq.s32.totalorder %s26, 0
      %s29 = sadd.s32 %s28, 1
      %s30 = scalar_select %p27, %s28, %s29
      %p33 = pneg %p27
      %p34 = scmp.eq.s32.totalorder %s18, 1
      %p35 = por %p33, %p34
      %p36 = scmp.ne.s32.totalorder %s28, %s31
      %p37 = scmp.eq.s32.totalorder %s18, 0
      %p38 = por %p36, %p37
      %p39 = scmp.ne.s32.totalorder %s28, %s31
      %p40 = scmp.eq.s32.totalorder %s23, 1
      %p41 = por %p39, %p40
      %p42 = scmp.ne.s32.totalorder %s31, %s32
      %p43 = scmp.eq.s32.totalorder %s23, 0
      %p44 = por %p42, %p43
      %p45 = scmp.ne.s32.totalorder %s31, %s32
      %p46 = scmp.eq.s32.totalorder %s24, 1
      %p47 = por %p45, %p46
      %p49 = scmp.ne.s32.totalorder %s32, %s48
      %p50 = scmp.eq.s32.totalorder %s24, 0
      %p51 = por %p49, %p50
      %s53 = sadd.s32 %s52, 1
      %p56 = scmp.eq.s32.totalorder %s18, 1
      %p57 = scmp.ne.s32.totalorder %s52, %s54
      %p58 = scmp.eq.s32.totalorder %s18, 0
      %p59 = por %p57, %p58
      %p60 = scmp.ne.s32.totalorder %s52, %s54
      %p61 = scmp.eq.s32.totalorder %s23, 1
      %p62 = por %p60, %p61
      %p63 = scmp.ne.s32.totalorder %s54, %s55
      %p64 = scmp.eq.s32.totalorder %s23, 0
      %p65 = por %p63, %p64
      %p66 = scmp.ne.s32.totalorder %s54, %s55
      %p67 = scmp.eq.s32.totalorder %s24, 1
      %p68 = por %p66, %p67
      %p70 = scmp.ne.s32.totalorder %s55, %s69
      %p71 = scmp.eq.s32.totalorder %s24, 0
      %p72 = por %p70, %p71
      %s74 = sadd.s32 %s73, 1
      %p77 = scmp.eq.s32.totalorder %s18, 1
      %p78 = scmp.ne.s32.totalorder %s73, %s75
      %p79 = scmp.eq.s32.totalorder %s18, 0
      %p80 = por %p78, %p79
      %p81 = scmp.ne.s32.totalorder %s73, %s75
      %p82 = scmp.eq.s32.totalorder %s23, 1
      %p83 = por %p81, %p82
      %p84 = scmp.ne.s32.totalorder %s75, %s76
      %p85 = scmp.eq.s32.totalorder %s23, 0
      %p86 = por %p84, %p85
      %p87 = scmp.ne.s32.totalorder %s75, %s76
      %p88 = scmp.eq.s32.totalorder %s24, 1
      %p89 = por %p87, %p88
      %p91 = scmp.ne.s32.totalorder %s76, %s90
      %p92 = scmp.eq.s32.totalorder %s24, 0
      %p93 = por %p91, %p92
      %s95 = sadd.s32 %s94, 1
      %p98 = scmp.eq.s32.totalorder %s18, 1
      %p99 = scmp.ne.s32.totalorder %s94, %s96
      %p100 = scmp.eq.s32.totalorder %s18, 0
      %p101 = por %p99, %p100
      %p102 = scmp.ne.s32.totalorder %s94, %s96
      %p103 = scmp.eq.s32.totalorder %s23, 1
      %p104 = por %p102, %p103
      %p105 = scmp.ne.s32.totalorder %s96, %s97
      %p106 = scmp.eq.s32.totalorder %s23, 0
      %p107 = por %p105, %p106
      %p108 = scmp.ne.s32.totalorder %s96, %s97
      %p109 = scmp.eq.s32.totalorder %s24, 1
      %p110 = por %p108, %p109
      %p112 = scmp.ne.s32.totalorder %s97, %s111
      %p113 = scmp.eq.s32.totalorder %s24, 0
      %p114 = por %p112, %p113
      %s116 = sadd.s32 %s115, 1
      %p119 = scmp.eq.s32.totalorder %s18, 1
      %p120 = scmp.ne.s32.totalorder %s115, %s117
      %p121 = scmp.eq.s32.totalorder %s18, 0
      %p122 = por %p120, %p121
      %p123 = scmp.ne.s32.totalorder %s115, %s117
      %p124 = scmp.eq.s32.totalorder %s23, 1
      %p125 = por %p123, %p124
      %p126 = scmp.ne.s32.totalorder %s117, %s118
      %p127 = scmp.eq.s32.totalorder %s23, 0
      %p128 = por %p126, %p127
      %p129 = scmp.ne.s32.totalorder %s117, %s118
      %p130 = scmp.eq.s32.totalorder %s24, 1
      %p131 = por %p129, %p130
      %p133 = scmp.ne.s32.totalorder %s118, %s132
      %p134 = scmp.eq.s32.totalorder %s24, 0
      %p135 = por %p133, %p134
      %s136 = ssub.s32 %s18, %s25
      %p137 = scmp.eq.s32.totalorder %s136, 0
      %s139 = sadd.s32 %s138, 1
      %s140 = scalar_select %p137, %s138, %s139
      %p143 = pneg %p137
      %p144 = scmp.eq.s32.totalorder %s18, 1
      %p145 = por %p143, %p144
      %p146 = scmp.ne.s32.totalorder %s138, %s141
      %p147 = scmp.eq.s32.totalorder %s18, 0
      %p148 = por %p146, %p147
      %p149 = scmp.ne.s32.totalorder %s138, %s141
      %p150 = scmp.eq.s32.totalorder %s23, 1
      %p151 = por %p149, %p150
      %p152 = scmp.ne.s32.totalorder %s141, %s142
      %p153 = scmp.eq.s32.totalorder %s23, 0
      %p154 = por %p152, %p153
      %p155 = scmp.ne.s32.totalorder %s141, %s142
      %p156 = scmp.eq.s32.totalorder %s24, 1
      %p157 = por %p155, %p156
      %p159 = scmp.ne.s32.totalorder %s142, %s158
      %p160 = scmp.eq.s32.totalorder %s24, 0
      %p161 = por %p159, %p160
      %p162 = scmp.le.s32.totalorder 1, %s18
      %p163 = scmp.lt.s32.totalorder %s18, 3
      %p164 = pnand %p162, %p163
      %p165 = pneg %p164
      // Predicated region
      $region9: #{tpu_custom_call.1} parent=5 // pred_check
        _
      $region10: #{tpu_custom_call.1} parent=5 // pred_check_branch
        %167 = sbr.rel (%p164) target = $region12
      $region11: #{tpu_custom_call.1} parent=5 // pred_region
        %s168 = ssub.s32 %s18, 1
        // Predicated region
        $region13: #{tpu_custom_call.1} parent=11 // pred_check
          %p169 = pneg %p65
        $region14: #{tpu_custom_call.1} parent=11 // pred_check_branch
          %171 = sbr.rel (%p169) target = $region16
        $region15: #{tpu_custom_call.1} parent=11 // pred_region
          %s173 = ssub.s32 25088, 25088
          %174 = vsyncadd [#allocation6], %s173
          %s175 = sshll.u32 [#allocation5], 4
          %s176 = int_to_ptr.vmem [resolvable:$true] %s175
          %181 = dma.hbm_to_vmem [thread:$0]  %s1, 25088, %s176, [#allocation6], 256, 256, 16
        $region16: #{tpu_custom_call.1} parent=11 // pred_fallthru
          _
        // Predicated region
        $region17: #{tpu_custom_call.1} parent=11 // pred_check
          %p182 = pneg %p86
        $region18: #{tpu_custom_call.1} parent=11 // pred_check_branch
          %184 = sbr.rel (%p182) target = $region20
        $region19: #{tpu_custom_call.1} parent=11 // pred_region
          _
        $region20: #{tpu_custom_call.1} parent=11 // pred_fallthru
          _
        // Predicated region
        $region21: #{tpu_custom_call.1} parent=11 // pred_check
          %p185 = pneg %p107
        $region22: #{tpu_custom_call.1} parent=11 // pred_check_branch
          %187 = sbr.rel (%p185) target = $region24
        $region23: #{tpu_custom_call.1} parent=11 // pred_region
          %s189 = ssub.s32 4096, 4096
          %190 = vsyncadd [#allocation6], %s189
          %s191 = sshll.u32 [#allocation7], 4
          %s192 = int_to_ptr.vmem [resolvable:$true] %s191
          %197 = dma.hbm_to_vmem [thread:$0]  %s3, 4096, %s192, [#allocation6], 64, 64, 4
        $region24: #{tpu_custom_call.1} parent=11 // pred_fallthru
          _
        // Predicated region
        $region25: #{tpu_custom_call.1} parent=11 // pred_check
          %p198 = pneg %p128
        $region26: #{tpu_custom_call.1} parent=11 // pred_check_branch
          %200 = sbr.rel (%p198) target = $region28
        $region27: #{tpu_custom_call.1} parent=11 // pred_region
          _
        $region28: #{tpu_custom_call.1} parent=11 // pred_fallthru
          _
      $region12: #{tpu_custom_call.1} parent=5 // pred_fallthru
        _
      %p201 = scmp.lt.s32.totalorder %s18, 2
      // Predicated region
      $region29: #{tpu_custom_call.1} parent=5 // pred_check
        %p202 = pneg %p201
      $region30: #{tpu_custom_call.1} parent=5 // pred_check_branch
        %204 = sbr.rel (%p202) target = $region32
      $region31: #{tpu_custom_call.1} parent=5 // pred_region
        // Predicated region
        $region33: #{tpu_custom_call.1} parent=31 // pred_check
          %p205 = pneg %p38
        $region34: #{tpu_custom_call.1} parent=31 // pred_check_branch
          %207 = sbr.rel (%p205) target = $region36
        $region35: #{tpu_custom_call.1} parent=31 // pred_region
          %s208 = sand.u32 %s28, 1
          %s209 = scalar_lea.sflag [#allocation3], %s208
          %s210 = sand.u32 %s28, 1
          %s211 = smul.addr %s210, 56
          %s212 = scalar_lea.vmem [#allocation2], %s211
          %s214 = ssub.s32 896, 896
          %215 = vsyncadd %s209, %s214
          %s216 = smul.addr %s18, 7
          %s217 = smul.addr %s216, 128
          %s218 = scalar_lea.hbm %s0, %s217
          %s220 = sshll.u32 %s212, 4
          %s221 = int_to_ptr.vmem [resolvable:$true] %s220
          %223 = dma.hbm_to_vmem [thread:$0]  %s218, 896, %s221, %s209
        $region36: #{tpu_custom_call.1} parent=31 // pred_fallthru
          _
      $region32: #{tpu_custom_call.1} parent=5 // pred_fallthru
        _
      %p224 = scmp.le.s32.totalorder 1, %s18
      %p225 = scmp.lt.s32.totalorder %s18, 3
      %p226 = pnand %p224, %p225
      %p227 = pneg %p226
      // Predicated region
      $region37: #{tpu_custom_call.1} parent=5 // pred_check
        _
      $region38: #{tpu_custom_call.1} parent=5 // pred_check_branch
        %229 = sbr.rel (%p226) target = $region40
      $region39: #{tpu_custom_call.1} parent=5 // pred_region
        %s230 = ssub.s32 %s18, 1
        %s231 = sand.u32 %s31, 1
        %s232 = scalar_lea.sflag [#allocation3], %s231
        %s233 = sand.u32 %s31, 1
        %s234 = smul.addr %s233, 56
        %s235 = scalar_lea.vmem [#allocation2], %s234
        // Predicated region
        $region41: #{tpu_custom_call.1} parent=39 // pred_check
          %p236 = pneg %p44
        $region42: #{tpu_custom_call.1} parent=39 // pred_check_branch
          %238 = sbr.rel (%p236) target = $region44
        $region43: #{tpu_custom_call.1} parent=39 // pred_region
          %239 = dma.done %s232, 896
        $region44: #{tpu_custom_call.1} parent=39 // pred_fallthru
          _
        // Predicated region
        $region45: #{tpu_custom_call.1} parent=39 // pred_check
          %p240 = pneg %p65
        $region46: #{tpu_custom_call.1} parent=39 // pred_check_branch
          %242 = sbr.rel (%p240) target = $region48
        $region47: #{tpu_custom_call.1} parent=39 // pred_region
          %243 = dma.done [#allocation6], 25088
        $region48: #{tpu_custom_call.1} parent=39 // pred_fallthru
          _
        // Predicated region
        $region49: #{tpu_custom_call.1} parent=39 // pred_check
          %p244 = pneg %p107
        $region50: #{tpu_custom_call.1} parent=39 // pred_check_branch
          %246 = sbr.rel (%p244) target = $region52
        $region51: #{tpu_custom_call.1} parent=39 // pred_region
          %247 = dma.done [#allocation6], 4096
        $region52: #{tpu_custom_call.1} parent=39 // pred_fallthru
          _
        %s248 = sand.u32 %s31, 1
        %s249 = scalar_lea.sflag [#allocation3], %s248
        %s250 = sand.u32 %s31, 1
        %s251 = smul.addr %s250, 56
        %s252 = scalar_lea.vmem [#allocation2], %s251
        %p253 = pneg %p44
        %p254 = pneg %p41
        %p255 = pneg %p65
        %p256 = pneg %p62
        %p257 = pneg %p86
        %p258 = pneg %p83
        %p259 = pneg %p107
        %p260 = pneg %p104
        %p261 = pneg %p128
        %p262 = pneg %p125
        %p263 = pneg %p154
        %p264 = pneg %p151
        %s265 = sand.u32 %s141, 1
        %s266 = scalar_lea.sflag [#allocation4], %s265
        %s267 = sand.u32 %s141, 1
        %s268 = smul.addr %s267, 4
        %s269 = scalar_lea.vmem [#allocation8], %s268
        %v271 = vld [vmem:[%s235] sm:$0xff]
        %v272 = vld [vmem:[%s235 + $0x8] sm:$0xff]
        %v273 = vld [vmem:[%s235 + $0x10] sm:$0xff]
        %v274 = vld [vmem:[%s235 + $0x18] sm:$0xff]
        %v275 = vld [vmem:[%s235 + $0x20] sm:$0xff]
        %v276 = vld [vmem:[%s235 + $0x28] sm:$0xff]
        %v277 = vld [vmem:[%s235 + $0x30] sm:$0xff]
        %v278 = vpack.c.bf16 %v271, %v271
        %v279 = vpack.c.bf16 %v272, %v272
        %v280 = vpack.c.bf16 %v273, %v273
        %v281 = vpack.c.bf16 %v274, %v274
        %v282 = vpack.c.bf16 %v275, %v275
        %v283 = vpack.c.bf16 %v276, %v276
        %v284 = vpack.c.bf16 %v277, %v277
        %v285 = vld [vmem:[#allocation5] sm:$0xff]
        %v286 = vld [vmem:[#allocation5 + $0x8] sm:$0xff]
        %v287 = vld [vmem:[#allocation5 + $0x10] sm:$0xff]
        %v288 = vld [vmem:[#allocation5 + $0x18] sm:$0xff]
        %v289 = vld [vmem:[#allocation5 + $0x20] sm:$0xff]
        %v290 = vld [vmem:[#allocation5 + $0x28] sm:$0xff]
        %v291 = vld [vmem:[#allocation5 + $0x30] sm:$0xff]
        %v292 = vld [vmem:[#allocation5 + $0x38] sm:$0xff]
        %v293 = vld [vmem:[#allocation5 + $0x40] sm:$0xff]
        %v294 = vld [vmem:[#allocation5 + $0x48] sm:$0xff]
        %v295 = vld [vmem:[#allocation5 + $0x50] sm:$0xff]
        %v296 = vld [vmem:[#allocation5 + $0x58] sm:$0xff]
        %v297 = vld [vmem:[#allocation5 + $0x60] sm:$0xff]
        %v298 = vld [vmem:[#allocation5 + $0x68] sm:$0xff]
        %v299 = vld [vmem:[#allocation5 + $0x70] sm:$0xff]
        %v300 = vld [vmem:[#allocation5 + $0x78] sm:$0xff]
        %v301 = vld [vmem:[#allocation5 + $0x80] sm:$0xff]
        %v302 = vld [vmem:[#allocation5 + $0x88] sm:$0xff]
        %v303 = vld [vmem:[#allocation5 + $0x90] sm:$0xff]
        %v304 = vld [vmem:[#allocation5 + $0x98] sm:$0xff]
        %v305 = vld [vmem:[#allocation5 + $0xa0] sm:$0xff]
        %v306 = vld [vmem:[#allocation5 + $0xa8] sm:$0xff]
        %v307 = vld [vmem:[#allocation5 + $0xb0] sm:$0xff]
        %v308 = vld [vmem:[#allocation5 + $0xb8] sm:$0xff]
        %v309 = vld [vmem:[#allocation5 + $0xc0] sm:$0xff]
        %v310 = vld [vmem:[#allocation5 + $0xc8] sm:$0xff]
        %v311 = vld [vmem:[#allocation5 + $0xd0] sm:$0xff]
        %v312 = vld [vmem:[#allocation5 + $0xd8] sm:$0xff]
        %v313 = vld [vmem:[#allocation5 + $0xe0] sm:$0xff]
        %v314 = vld [vmem:[#allocation5 + $0xe8] sm:$0xff]
        %v315 = vld [vmem:[#allocation5 + $0xf0] sm:$0xff]
        %v316 = vld [vmem:[#allocation5 + $0xf8] sm:$0xff]
        %v317 = vld [vmem:[#allocation5 + $0x100] sm:$0xff]
        %v318 = vld [vmem:[#allocation5 + $0x108] sm:$0xff]
        %v319 = vld [vmem:[#allocation5 + $0x110] sm:$0xff]
        %v320 = vld [vmem:[#allocation5 + $0x118] sm:$0xff]
        %v321 = vld [vmem:[#allocation5 + $0x120] sm:$0xff]
        %v322 = vld [vmem:[#allocation5 + $0x128] sm:$0xff]
        %v323 = vld [vmem:[#allocation5 + $0x130] sm:$0xff]
        %v324 = vld [vmem:[#allocation5 + $0x138] sm:$0xff]
        %v325 = vld [vmem:[#allocation5 + $0x140] sm:$0xff]
        %v326 = vld [vmem:[#allocation5 + $0x148] sm:$0xff]
        %v327 = vld [vmem:[#allocation5 + $0x150] sm:$0xff]
        %v328 = vld [vmem:[#allocation5 + $0x158] sm:$0xff]
        %v329 = vld [vmem:[#allocation5 + $0x160] sm:$0xff]
        %v330 = vld [vmem:[#allocation5 + $0x168] sm:$0xff]
        %v331 = vld [vmem:[#allocation5 + $0x170] sm:$0xff]
        %v332 = vld [vmem:[#allocation5 + $0x178] sm:$0xff]
        %v333 = vld [vmem:[#allocation5 + $0x180] sm:$0xff]
        %v334 = vld [vmem:[#allocation5 + $0x188] sm:$0xff]
        %v335 = vld [vmem:[#allocation5 + $0x190] sm:$0xff]
        %v336 = vld [vmem:[#allocation5 + $0x198] sm:$0xff]
        %v337 = vld [vmem:[#allocation5 + $0x1a0] sm:$0xff]
        %v338 = vld [vmem:[#allocation5 + $0x1a8] sm:$0xff]
        %v339 = vld [vmem:[#allocation5 + $0x1b0] sm:$0xff]
        %v340 = vld [vmem:[#allocation5 + $0x1b8] sm:$0xff]
        %v341 = vld [vmem:[#allocation5 + $0x1c0] sm:$0xff]
        %v342 = vld [vmem:[#allocation5 + $0x1c8] sm:$0xff]
        %v343 = vld [vmem:[#allocation5 + $0x1d0] sm:$0xff]
        %v344 = vld [vmem:[#allocation5 + $0x1d8] sm:$0xff]
        %v345 = vld [vmem:[#allocation5 + $0x1e0] sm:$0xff]
        %v346 = vld [vmem:[#allocation5 + $0x1e8] sm:$0xff]
        %v347 = vld [vmem:[#allocation5 + $0x1f0] sm:$0xff]
        %v348 = vld [vmem:[#allocation5 + $0x1f8] sm:$0xff]
        %v349 = vld [vmem:[#allocation5 + $0x200] sm:$0xff]
        %v350 = vld [vmem:[#allocation5 + $0x208] sm:$0xff]
        %v351 = vld [vmem:[#allocation5 + $0x210] sm:$0xff]
        %v352 = vld [vmem:[#allocation5 + $0x218] sm:$0xff]
        %v353 = vld [vmem:[#allocation5 + $0x220] sm:$0xff]
        %v354 = vld [vmem:[#allocation5 + $0x228] sm:$0xff]
        %v355 = vld [vmem:[#allocation5 + $0x230] sm:$0xff]
        %v356 = vld [vmem:[#allocation5 + $0x238] sm:$0xff]
        %v357 = vld [vmem:[#allocation5 + $0x240] sm:$0xff]
        %v358 = vld [vmem:[#allocation5 + $0x248] sm:$0xff]
        %v359 = vld [vmem:[#allocation5 + $0x250] sm:$0xff]
        %v360 = vld [vmem:[#allocation5 + $0x258] sm:$0xff]
        %v361 = vld [vmem:[#allocation5 + $0x260] sm:$0xff]
        %v362 = vld [vmem:[#allocation5 + $0x268] sm:$0xff]
        %v363 = vld [vmem:[#allocation5 + $0x270] sm:$0xff]
        %v364 = vld [vmem:[#allocation5 + $0x278] sm:$0xff]
        %v365 = vld [vmem:[#allocation5 + $0x280] sm:$0xff]
        %v366 = vld [vmem:[#allocation5 + $0x288] sm:$0xff]
        %v367 = vld [vmem:[#allocation5 + $0x290] sm:$0xff]
        %v368 = vld [vmem:[#allocation5 + $0x298] sm:$0xff]
        %v369 = vld [vmem:[#allocation5 + $0x2a0] sm:$0xff]
        %v370 = vld [vmem:[#allocation5 + $0x2a8] sm:$0xff]
        %v371 = vld [vmem:[#allocation5 + $0x2b0] sm:$0xff]
        %v372 = vld [vmem:[#allocation5 + $0x2b8] sm:$0xff]
        %v373 = vld [vmem:[#allocation5 + $0x2c0] sm:$0xff]
        %v374 = vld [vmem:[#allocation5 + $0x2c8] sm:$0xff]
        %v375 = vld [vmem:[#allocation5 + $0x2d0] sm:$0xff]
        %v376 = vld [vmem:[#allocation5 + $0x2d8] sm:$0xff]
        %v377 = vld [vmem:[#allocation5 + $0x2e0] sm:$0xff]
        %v378 = vld [vmem:[#allocation5 + $0x2e8] sm:$0xff]
        %v379 = vld [vmem:[#allocation5 + $0x2f0] sm:$0xff]
        %v380 = vld [vmem:[#allocation5 + $0x2f8] sm:$0xff]
        %v381 = vld [vmem:[#allocation5 + $0x300] sm:$0xff]
        %v382 = vld [vmem:[#allocation5 + $0x308] sm:$0xff]
        %v383 = vld [vmem:[#allocation5 + $0x310] sm:$0xff]
        %v384 = vld [vmem:[#allocation5 + $0x318] sm:$0xff]
        %v385 = vld [vmem:[#allocation5 + $0x320] sm:$0xff]
        %v386 = vld [vmem:[#allocation5 + $0x328] sm:$0xff]
        %v387 = vld [vmem:[#allocation5 + $0x330] sm:$0xff]
        %v388 = vld [vmem:[#allocation5 + $0x338] sm:$0xff]
        %v389 = vld [vmem:[#allocation5 + $0x340] sm:$0xff]
        %v390 = vld [vmem:[#allocation5 + $0x348] sm:$0xff]
        %v391 = vld [vmem:[#allocation5 + $0x350] sm:$0xff]
        %v392 = vld [vmem:[#allocation5 + $0x358] sm:$0xff]
        %v393 = vld [vmem:[#allocation5 + $0x360] sm:$0xff]
        %v394 = vld [vmem:[#allocation5 + $0x368] sm:$0xff]
        %v395 = vld [vmem:[#allocation5 + $0x370] sm:$0xff]
        %v396 = vld [vmem:[#allocation5 + $0x378] sm:$0xff]
        %v397 = vld [vmem:[#allocation5 + $0x380] sm:$0xff]
        %v398 = vld [vmem:[#allocation5 + $0x388] sm:$0xff]
        %v399 = vld [vmem:[#allocation5 + $0x390] sm:$0xff]
        %v400 = vld [vmem:[#allocation5 + $0x398] sm:$0xff]
        %v401 = vld [vmem:[#allocation5 + $0x3a0] sm:$0xff]
        %v402 = vld [vmem:[#allocation5 + $0x3a8] sm:$0xff]
        %v403 = vld [vmem:[#allocation5 + $0x3b0] sm:$0xff]
        %v404 = vld [vmem:[#allocation5 + $0x3b8] sm:$0xff]
        %v405 = vld [vmem:[#allocation5 + $0x3c0] sm:$0xff]
        %v406 = vld [vmem:[#allocation5 + $0x3c8] sm:$0xff]
        %v407 = vld [vmem:[#allocation5 + $0x3d0] sm:$0xff]
        %v408 = vld [vmem:[#allocation5 + $0x3d8] sm:$0xff]
        %v409 = vld [vmem:[#allocation5 + $0x3e0] sm:$0xff]
        %v410 = vld [vmem:[#allocation5 + $0x3e8] sm:$0xff]
        %v411 = vld [vmem:[#allocation5 + $0x3f0] sm:$0xff]
        %v412 = vld [vmem:[#allocation5 + $0x3f8] sm:$0xff]
        %v413 = vld [vmem:[#allocation5 + $0x400] sm:$0xff]
        %v414 = vld [vmem:[#allocation5 + $0x408] sm:$0xff]
        %v415 = vld [vmem:[#allocation5 + $0x410] sm:$0xff]
        %v416 = vld [vmem:[#allocation5 + $0x418] sm:$0xff]
        %v417 = vld [vmem:[#allocation5 + $0x420] sm:$0xff]
        %v418 = vld [vmem:[#allocation5 + $0x428] sm:$0xff]
        %v419 = vld [vmem:[#allocation5 + $0x430] sm:$0xff]
        %v420 = vld [vmem:[#allocation5 + $0x438] sm:$0xff]
        %v421 = vld [vmem:[#allocation5 + $0x440] sm:$0xff]
        %v422 = vld [vmem:[#allocation5 + $0x448] sm:$0xff]
        %v423 = vld [vmem:[#allocation5 + $0x450] sm:$0xff]
        %v424 = vld [vmem:[#allocation5 + $0x458] sm:$0xff]
        %v425 = vld [vmem:[#allocation5 + $0x460] sm:$0xff]
        %v426 = vld [vmem:[#allocation5 + $0x468] sm:$0xff]
        %v427 = vld [vmem:[#allocation5 + $0x470] sm:$0xff]
        %v428 = vld [vmem:[#allocation5 + $0x478] sm:$0xff]
        %v429 = vld [vmem:[#allocation5 + $0x480] sm:$0xff]
        %v430 = vld [vmem:[#allocation5 + $0x488] sm:$0xff]
        %v431 = vld [vmem:[#allocation5 + $0x490] sm:$0xff]
        %v432 = vld [vmem:[#allocation5 + $0x498] sm:$0xff]
        %v433 = vld [vmem:[#allocation5 + $0x4a0] sm:$0xff]
        %v434 = vld [vmem:[#allocation5 + $0x4a8] sm:$0xff]
        %v435 = vld [vmem:[#allocation5 + $0x4b0] sm:$0xff]
        %v436 = vld [vmem:[#allocation5 + $0x4b8] sm:$0xff]
        %v437 = vld [vmem:[#allocation5 + $0x4c0] sm:$0xff]
        %v438 = vld [vmem:[#allocation5 + $0x4c8] sm:$0xff]
        %v439 = vld [vmem:[#allocation5 + $0x4d0] sm:$0xff]
        %v440 = vld [vmem:[#allocation5 + $0x4d8] sm:$0xff]
        %v441 = vld [vmem:[#allocation5 + $0x4e0] sm:$0xff]
        %v442 = vld [vmem:[#allocation5 + $0x4e8] sm:$0xff]
        %v443 = vld [vmem:[#allocation5 + $0x4f0] sm:$0xff]
        %v444 = vld [vmem:[#allocation5 + $0x4f8] sm:$0xff]
        %v445 = vld [vmem:[#allocation5 + $0x500] sm:$0xff]
        %v446 = vld [vmem:[#allocation5 + $0x508] sm:$0xff]
        %v447 = vld [vmem:[#allocation5 + $0x510] sm:$0xff]
        %v448 = vld [vmem:[#allocation5 + $0x518] sm:$0xff]
        %v449 = vld [vmem:[#allocation5 + $0x520] sm:$0xff]
        %v450 = vld [vmem:[#allocation5 + $0x528] sm:$0xff]
        %v451 = vld [vmem:[#allocation5 + $0x530] sm:$0xff]
        %v452 = vld [vmem:[#allocation5 + $0x538] sm:$0xff]
        %v453 = vld [vmem:[#allocation5 + $0x540] sm:$0xff]
        %v454 = vld [vmem:[#allocation5 + $0x548] sm:$0xff]
        %v455 = vld [vmem:[#allocation5 + $0x550] sm:$0xff]
        %v456 = vld [vmem:[#allocation5 + $0x558] sm:$0xff]
        %v457 = vld [vmem:[#allocation5 + $0x560] sm:$0xff]
        %v458 = vld [vmem:[#allocation5 + $0x568] sm:$0xff]
        %v459 = vld [vmem:[#allocation5 + $0x570] sm:$0xff]
        %v460 = vld [vmem:[#allocation5 + $0x578] sm:$0xff]
        %v461 = vld [vmem:[#allocation5 + $0x580] sm:$0xff]
        %v462 = vld [vmem:[#allocation5 + $0x588] sm:$0xff]
        %v463 = vld [vmem:[#allocation5 + $0x590] sm:$0xff]
        %v464 = vld [vmem:[#allocation5 + $0x598] sm:$0xff]
        %v465 = vld [vmem:[#allocation5 + $0x5a0] sm:$0xff]
        %v466 = vld [vmem:[#allocation5 + $0x5a8] sm:$0xff]
        %v467 = vld [vmem:[#allocation5 + $0x5b0] sm:$0xff]
        %v468 = vld [vmem:[#allocation5 + $0x5b8] sm:$0xff]
        %v469 = vld [vmem:[#allocation5 + $0x5c0] sm:$0xff]
        %v470 = vld [vmem:[#allocation5 + $0x5c8] sm:$0xff]
        %v471 = vld [vmem:[#allocation5 + $0x5d0] sm:$0xff]
        %v472 = vld [vmem:[#allocation5 + $0x5d8] sm:$0xff]
        %v473 = vld [vmem:[#allocation5 + $0x5e0] sm:$0xff]
        %v474 = vld [vmem:[#allocation5 + $0x5e8] sm:$0xff]
        %v475 = vld [vmem:[#allocation5 + $0x5f0] sm:$0xff]
        %v476 = vld [vmem:[#allocation5 + $0x5f8] sm:$0xff]
        %v477 = vld [vmem:[#allocation5 + $0x600] sm:$0xff]
        %v478 = vld [vmem:[#allocation5 + $0x608] sm:$0xff]
        %v479 = vld [vmem:[#allocation5 + $0x610] sm:$0xff]
        %v480 = vld [vmem:[#allocation5 + $0x618] sm:$0xff]
        %v481 = vld [vmem:[%s2] sm:$0xf]
        %v483 = vlaneseq
        %v484 = vshrl.u32 %v483, 7
        %v485 = vsub.s32 0, %v484
        %v486 = vrot.slane %v481, %v485
        %v487 = vlaneseq
        %v488 = vshrl.u32 %v487, 7
        %v489 = vsub.s32 1, %v488
        %v490 = vrot.slane %v481, %v489
        %v491 = vlaneseq
        %v492 = vshrl.u32 %v491, 7
        %v493 = vsub.s32 2, %v492
        %v494 = vrot.slane %v481, %v493
        %v495 = vlaneseq
        %v496 = vshrl.u32 %v495, 7
        %v497 = vsub.s32 3, %v496
        %v498 = vrot.slane %v481, %v497
        %v699 = vunpack.c.l.b16 %v285
        %v700 = vunpack.c.h.b16 %v285
        %v701 = vunpack.c.l.b16 %v286
        %v702 = vunpack.c.h.b16 %v286
        %v703 = vunpack.c.l.b16 %v287
        %v704 = vunpack.c.h.b16 %v287
        %v705 = vunpack.c.l.b16 %v288
        %v706 = vunpack.c.h.b16 %v288
        %v707 = vunpack.c.l.b16 %v289
        %v708 = vunpack.c.h.b16 %v289
        %v709 = vunpack.c.l.b16 %v290
        %v710 = vunpack.c.h.b16 %v290
        %v711 = vunpack.c.l.b16 %v291
        %v712 = vunpack.c.h.b16 %v291
        %v713 = vunpack.c.l.b16 %v292
        %v714 = vunpack.c.h.b16 %v292
        %v715 = vunpack.c.l.b16 %v293
        %v716 = vunpack.c.h.b16 %v293
        %v717 = vunpack.c.l.b16 %v294
        %v718 = vunpack.c.h.b16 %v294
        %v719 = vunpack.c.l.b16 %v295
        %v720 = vunpack.c.h.b16 %v295
        %v721 = vunpack.c.l.b16 %v296
        %v722 = vunpack.c.h.b16 %v296
        %v723 = vunpack.c.l.b16 %v297
        %v724 = vunpack.c.h.b16 %v297
        %v725 = vunpack.c.l.b16 %v298
        %v726 = vunpack.c.h.b16 %v298
        %v727 = vunpack.c.l.b16 %v299
        %v728 = vunpack.c.h.b16 %v299
        %v729 = vunpack.c.l.b16 %v300
        %v730 = vunpack.c.h.b16 %v300
        %v731 = vunpack.c.l.b16 %v301
        %v732 = vunpack.c.h.b16 %v301
        %v733 = vunpack.c.l.b16 %v302
        %v734 = vunpack.c.h.b16 %v302
        %v735 = vunpack.c.l.b16 %v303
        %v736 = vunpack.c.h.b16 %v303
        %v737 = vunpack.c.l.b16 %v304
        %v738 = vunpack.c.h.b16 %v304
        %v739 = vunpack.c.l.b16 %v305
        %v740 = vunpack.c.h.b16 %v305
        %v741 = vunpack.c.l.b16 %v306
        %v742 = vunpack.c.h.b16 %v306
        %v743 = vunpack.c.l.b16 %v307
        %v744 = vunpack.c.h.b16 %v307
        %v745 = vunpack.c.l.b16 %v308
        %v746 = vunpack.c.h.b16 %v308
        %v747 = vunpack.c.l.b16 %v309
        %v748 = vunpack.c.h.b16 %v309
        %v749 = vunpack.c.l.b16 %v310
        %v750 = vunpack.c.h.b16 %v310
        %v751 = vunpack.c.l.b16 %v311
        %v752 = vunpack.c.h.b16 %v311
        %v753 = vunpack.c.l.b16 %v312
        %v754 = vunpack.c.h.b16 %v312
        %v755 = vunpack.c.l.b16 %v313
        %v756 = vunpack.c.h.b16 %v313
        %v757 = vunpack.c.l.b16 %v314
        %v758 = vunpack.c.h.b16 %v314
        %v759 = vunpack.c.l.b16 %v315
        %v760 = vunpack.c.h.b16 %v315
        %v761 = vunpack.c.l.b16 %v316
        %v762 = vunpack.c.h.b16 %v316
        %v763 = vunpack.c.l.b16 %v317
        %v764 = vunpack.c.h.b16 %v317
        %v765 = vunpack.c.l.b16 %v318
        %v766 = vunpack.c.h.b16 %v318
        %v767 = vunpack.c.l.b16 %v319
        %v768 = vunpack.c.h.b16 %v319
        %v769 = vunpack.c.l.b16 %v320
        %v770 = vunpack.c.h.b16 %v320
        %v771 = vunpack.c.l.b16 %v321
        %v772 = vunpack.c.h.b16 %v321
        %v773 = vunpack.c.l.b16 %v322
        %v774 = vunpack.c.h.b16 %v322
        %v775 = vunpack.c.l.b16 %v323
        %v776 = vunpack.c.h.b16 %v323
        %v777 = vunpack.c.l.b16 %v324
        %v778 = vunpack.c.h.b16 %v324
        %v779 = vunpack.c.l.b16 %v325
        %v780 = vunpack.c.h.b16 %v325
        %v781 = vunpack.c.l.b16 %v326
        %v782 = vunpack.c.h.b16 %v326
        %v783 = vunpack.c.l.b16 %v327
        %v784 = vunpack.c.h.b16 %v327
        %v785 = vunpack.c.l.b16 %v328
        %v786 = vunpack.c.h.b16 %v328
        %v787 = vunpack.c.l.b16 %v329
        %v788 = vunpack.c.h.b16 %v329
        %v789 = vunpack.c.l.b16 %v330
        %v790 = vunpack.c.h.b16 %v330
        %v791 = vunpack.c.l.b16 %v331
        %v792 = vunpack.c.h.b16 %v331
        %v793 = vunpack.c.l.b16 %v332
        %v794 = vunpack.c.h.b16 %v332
        %v795 = vunpack.c.l.b16 %v333
        %v796 = vunpack.c.h.b16 %v333
        %v797 = vunpack.c.l.b16 %v334
        %v798 = vunpack.c.h.b16 %v334
        %v799 = vunpack.c.l.b16 %v335
        %v800 = vunpack.c.h.b16 %v335
        %v801 = vunpack.c.l.b16 %v336
        %v802 = vunpack.c.h.b16 %v336
        %v803 = vunpack.c.l.b16 %v337
        %v804 = vunpack.c.h.b16 %v337
        %v805 = vunpack.c.l.b16 %v338
        %v806 = vunpack.c.h.b16 %v338
        %v807 = vunpack.c.l.b16 %v339
        %v808 = vunpack.c.h.b16 %v339
        %v809 = vunpack.c.l.b16 %v340
        %v810 = vunpack.c.h.b16 %v340
        %v811 = vunpack.c.l.b16 %v341
        %v812 = vunpack.c.h.b16 %v341
        %v813 = vunpack.c.l.b16 %v342
        %v814 = vunpack.c.h.b16 %v342
        %v815 = vunpack.c.l.b16 %v343
        %v816 = vunpack.c.h.b16 %v343
        %v817 = vunpack.c.l.b16 %v344
        %v818 = vunpack.c.h.b16 %v344
        %v819 = vunpack.c.l.b16 %v345
        %v820 = vunpack.c.h.b16 %v345
        %v821 = vunpack.c.l.b16 %v346
        %v822 = vunpack.c.h.b16 %v346
        %v823 = vunpack.c.l.b16 %v347
        %v824 = vunpack.c.h.b16 %v347
        %v825 = vunpack.c.l.b16 %v348
        %v826 = vunpack.c.h.b16 %v348
        %v827 = vunpack.c.l.b16 %v349
        %v828 = vunpack.c.h.b16 %v349
        %v829 = vunpack.c.l.b16 %v350
        %v830 = vunpack.c.h.b16 %v350
        %v831 = vunpack.c.l.b16 %v351
        %v832 = vunpack.c.h.b16 %v351
        %v833 = vunpack.c.l.b16 %v352
        %v834 = vunpack.c.h.b16 %v352
        %v835 = vunpack.c.l.b16 %v353
        %v836 = vunpack.c.h.b16 %v353
        %v837 = vunpack.c.l.b16 %v354
        %v838 = vunpack.c.h.b16 %v354
        %v839 = vunpack.c.l.b16 %v355
        %v840 = vunpack.c.h.b16 %v355
        %v841 = vunpack.c.l.b16 %v356
        %v842 = vunpack.c.h.b16 %v356
        %v843 = vunpack.c.l.b16 %v357
        %v844 = vunpack.c.h.b16 %v357
        %v845 = vunpack.c.l.b16 %v358
        %v846 = vunpack.c.h.b16 %v358
        %v847 = vunpack.c.l.b16 %v359
        %v848 = vunpack.c.h.b16 %v359
        %v849 = vunpack.c.l.b16 %v360
        %v850 = vunpack.c.h.b16 %v360
        %v851 = vunpack.c.l.b16 %v361
        %v852 = vunpack.c.h.b16 %v361
        %v853 = vunpack.c.l.b16 %v362
        %v854 = vunpack.c.h.b16 %v362
        %v855 = vunpack.c.l.b16 %v363
        %v856 = vunpack.c.h.b16 %v363
        %v857 = vunpack.c.l.b16 %v364
        %v858 = vunpack.c.h.b16 %v364
        %v859 = vunpack.c.l.b16 %v365
        %v860 = vunpack.c.h.b16 %v365
        %v861 = vunpack.c.l.b16 %v366
        %v862 = vunpack.c.h.b16 %v366
        %v863 = vunpack.c.l.b16 %v367
        %v864 = vunpack.c.h.b16 %v367
        %v865 = vunpack.c.l.b16 %v368
        %v866 = vunpack.c.h.b16 %v368
        %v867 = vunpack.c.l.b16 %v369
        %v868 = vunpack.c.h.b16 %v369
        %v869 = vunpack.c.l.b16 %v370
        %v870 = vunpack.c.h.b16 %v370
        %v871 = vunpack.c.l.b16 %v371
        %v872 = vunpack.c.h.b16 %v371
        %v873 = vunpack.c.l.b16 %v372
        %v874 = vunpack.c.h.b16 %v372
        %v875 = vunpack.c.l.b16 %v373
        %v876 = vunpack.c.h.b16 %v373
        %v877 = vunpack.c.l.b16 %v374
        %v878 = vunpack.c.h.b16 %v374
        %v879 = vunpack.c.l.b16 %v375
        %v880 = vunpack.c.h.b16 %v375
        %v881 = vunpack.c.l.b16 %v376
        %v882 = vunpack.c.h.b16 %v376
        %v883 = vunpack.c.l.b16 %v377
        %v884 = vunpack.c.h.b16 %v377
        %v885 = vunpack.c.l.b16 %v378
        %v886 = vunpack.c.h.b16 %v378
        %v887 = vunpack.c.l.b16 %v379
        %v888 = vunpack.c.h.b16 %v379
        %v889 = vunpack.c.l.b16 %v380
        %v890 = vunpack.c.h.b16 %v380
        %v891 = vunpack.c.l.b16 %v381
        %v892 = vunpack.c.h.b16 %v381
        %v893 = vunpack.c.l.b16 %v382
        %v894 = vunpack.c.h.b16 %v382
        %v895 = vunpack.c.l.b16 %v383
        %v896 = vunpack.c.h.b16 %v383
        %v897 = vunpack.c.l.b16 %v384
        %v898 = vunpack.c.h.b16 %v384
        %v899 = vunpack.c.l.b16 %v385
        %v900 = vunpack.c.h.b16 %v385
        %v901 = vunpack.c.l.b16 %v386
        %v902 = vunpack.c.h.b16 %v386
        %v903 = vunpack.c.l.b16 %v387
        %v904 = vunpack.c.h.b16 %v387
        %v905 = vunpack.c.l.b16 %v388
        %v906 = vunpack.c.h.b16 %v388
        %v907 = vunpack.c.l.b16 %v389
        %v908 = vunpack.c.h.b16 %v389
        %v909 = vunpack.c.l.b16 %v390
        %v910 = vunpack.c.h.b16 %v390
        %v911 = vunpack.c.l.b16 %v391
        %v912 = vunpack.c.h.b16 %v391
        %v913 = vunpack.c.l.b16 %v392
        %v914 = vunpack.c.h.b16 %v392
        %v915 = vunpack.c.l.b16 %v393
        %v916 = vunpack.c.h.b16 %v393
        %v917 = vunpack.c.l.b16 %v394
        %v918 = vunpack.c.h.b16 %v394
        %v919 = vunpack.c.l.b16 %v395
        %v920 = vunpack.c.h.b16 %v395
        %v921 = vunpack.c.l.b16 %v396
        %v922 = vunpack.c.h.b16 %v396
        %v923 = vunpack.c.l.b16 %v397
        %v924 = vunpack.c.h.b16 %v397
        %v925 = vunpack.c.l.b16 %v398
        %v926 = vunpack.c.h.b16 %v398
        %v927 = vunpack.c.l.b16 %v399
        %v928 = vunpack.c.h.b16 %v399
        %v929 = vunpack.c.l.b16 %v400
        %v930 = vunpack.c.h.b16 %v400
        %v931 = vunpack.c.l.b16 %v401
        %v932 = vunpack.c.h.b16 %v401
        %v933 = vunpack.c.l.b16 %v402
        %v934 = vunpack.c.h.b16 %v402
        %v935 = vunpack.c.l.b16 %v403
        %v936 = vunpack.c.h.b16 %v403
        %v937 = vunpack.c.l.b16 %v404
        %v938 = vunpack.c.h.b16 %v404
        %v939 = vunpack.c.l.b16 %v405
        %v940 = vunpack.c.h.b16 %v405
        %v941 = vunpack.c.l.b16 %v406
        %v942 = vunpack.c.h.b16 %v406
        %v943 = vunpack.c.l.b16 %v407
        %v944 = vunpack.c.h.b16 %v407
        %v945 = vunpack.c.l.b16 %v408
        %v946 = vunpack.c.h.b16 %v408
        %v947 = vunpack.c.l.b16 %v409
        %v948 = vunpack.c.h.b16 %v409
        %v949 = vunpack.c.l.b16 %v410
        %v950 = vunpack.c.h.b16 %v410
        %v951 = vunpack.c.l.b16 %v411
        %v952 = vunpack.c.h.b16 %v411
        %v953 = vunpack.c.l.b16 %v412
        %v954 = vunpack.c.h.b16 %v412
        %v955 = vunpack.c.l.b16 %v413
        %v956 = vunpack.c.h.b16 %v413
        %v957 = vunpack.c.l.b16 %v414
        %v958 = vunpack.c.h.b16 %v414
        %v959 = vunpack.c.l.b16 %v415
        %v960 = vunpack.c.h.b16 %v415
        %v961 = vunpack.c.l.b16 %v416
        %v962 = vunpack.c.h.b16 %v416
        %v963 = vunpack.c.l.b16 %v417
        %v964 = vunpack.c.h.b16 %v417
        %v965 = vunpack.c.l.b16 %v418
        %v966 = vunpack.c.h.b16 %v418
        %v967 = vunpack.c.l.b16 %v419
        %v968 = vunpack.c.h.b16 %v419
        %v969 = vunpack.c.l.b16 %v420
        %v970 = vunpack.c.h.b16 %v420
        %v971 = vunpack.c.l.b16 %v421
        %v972 = vunpack.c.h.b16 %v421
        %v973 = vunpack.c.l.b16 %v422
        %v974 = vunpack.c.h.b16 %v422
        %v975 = vunpack.c.l.b16 %v423
        %v976 = vunpack.c.h.b16 %v423
        %v977 = vunpack.c.l.b16 %v424
        %v978 = vunpack.c.h.b16 %v424
        %v979 = vunpack.c.l.b16 %v425
        %v980 = vunpack.c.h.b16 %v425
        %v981 = vunpack.c.l.b16 %v426
        %v982 = vunpack.c.h.b16 %v426
        %v983 = vunpack.c.l.b16 %v427
        %v984 = vunpack.c.h.b16 %v427
        %v985 = vunpack.c.l.b16 %v428
        %v986 = vunpack.c.h.b16 %v428
        %v987 = vunpack.c.l.b16 %v429
        %v988 = vunpack.c.h.b16 %v429
        %v989 = vunpack.c.l.b16 %v430
        %v990 = vunpack.c.h.b16 %v430
        %v991 = vunpack.c.l.b16 %v431
        %v992 = vunpack.c.h.b16 %v431
        %v993 = vunpack.c.l.b16 %v432
        %v994 = vunpack.c.h.b16 %v432
        %v995 = vunpack.c.l.b16 %v433
        %v996 = vunpack.c.h.b16 %v433
        %v997 = vunpack.c.l.b16 %v434
        %v998 = vunpack.c.h.b16 %v434
        %v999 = vunpack.c.l.b16 %v435
        %v1000 = vunpack.c.h.b16 %v435
        %v1001 = vunpack.c.l.b16 %v436
        %v1002 = vunpack.c.h.b16 %v436
        %v1003 = vunpack.c.l.b16 %v437
        %v1004 = vunpack.c.h.b16 %v437
        %v1005 = vunpack.c.l.b16 %v438
        %v1006 = vunpack.c.h.b16 %v438
        %v1007 = vunpack.c.l.b16 %v439
        %v1008 = vunpack.c.h.b16 %v439
        %v1009 = vunpack.c.l.b16 %v440
        %v1010 = vunpack.c.h.b16 %v440
        %v1011 = vunpack.c.l.b16 %v441
        %v1012 = vunpack.c.h.b16 %v441
        %v1013 = vunpack.c.l.b16 %v442
        %v1014 = vunpack.c.h.b16 %v442
        %v1015 = vunpack.c.l.b16 %v443
        %v1016 = vunpack.c.h.b16 %v443
        %v1017 = vunpack.c.l.b16 %v444
        %v1018 = vunpack.c.h.b16 %v444
        %v1019 = vunpack.c.l.b16 %v445
        %v1020 = vunpack.c.h.b16 %v445
        %v1021 = vunpack.c.l.b16 %v446
        %v1022 = vunpack.c.h.b16 %v446
        %v1023 = vunpack.c.l.b16 %v447
        %v1024 = vunpack.c.h.b16 %v447
        %v1025 = vunpack.c.l.b16 %v448
        %v1026 = vunpack.c.h.b16 %v448
        %v1027 = vunpack.c.l.b16 %v449
        %v1028 = vunpack.c.h.b16 %v449
        %v1029 = vunpack.c.l.b16 %v450
        %v1030 = vunpack.c.h.b16 %v450
        %v1031 = vunpack.c.l.b16 %v451
        %v1032 = vunpack.c.h.b16 %v451
        %v1033 = vunpack.c.l.b16 %v452
        %v1034 = vunpack.c.h.b16 %v452
        %v1035 = vunpack.c.l.b16 %v453
        %v1036 = vunpack.c.h.b16 %v453
        %v1037 = vunpack.c.l.b16 %v454
        %v1038 = vunpack.c.h.b16 %v454
        %v1039 = vunpack.c.l.b16 %v455
        %v1040 = vunpack.c.h.b16 %v455
        %v1041 = vunpack.c.l.b16 %v456
        %v1042 = vunpack.c.h.b16 %v456
        %v1043 = vunpack.c.l.b16 %v457
        %v1044 = vunpack.c.h.b16 %v457
        %v1045 = vunpack.c.l.b16 %v458
        %v1046 = vunpack.c.h.b16 %v458
        %v1047 = vunpack.c.l.b16 %v459
        %v1048 = vunpack.c.h.b16 %v459
        %v1049 = vunpack.c.l.b16 %v460
        %v1050 = vunpack.c.h.b16 %v460
        %v1051 = vunpack.c.l.b16 %v461
        %v1052 = vunpack.c.h.b16 %v461
        %v1053 = vunpack.c.l.b16 %v462
        %v1054 = vunpack.c.h.b16 %v462
        %v1055 = vunpack.c.l.b16 %v463
        %v1056 = vunpack.c.h.b16 %v463
        %v1057 = vunpack.c.l.b16 %v464
        %v1058 = vunpack.c.h.b16 %v464
        %v1059 = vunpack.c.l.b16 %v465
        %v1060 = vunpack.c.h.b16 %v465
        %v1061 = vunpack.c.l.b16 %v466
        %v1062 = vunpack.c.h.b16 %v466
        %v1063 = vunpack.c.l.b16 %v467
        %v1064 = vunpack.c.h.b16 %v467
        %v1065 = vunpack.c.l.b16 %v468
        %v1066 = vunpack.c.h.b16 %v468
        %v1067 = vunpack.c.l.b16 %v469
        %v1068 = vunpack.c.h.b16 %v469
        %v1069 = vunpack.c.l.b16 %v470
        %v1070 = vunpack.c.h.b16 %v470
        %v1071 = vunpack.c.l.b16 %v471
        %v1072 = vunpack.c.h.b16 %v471
        %v1073 = vunpack.c.l.b16 %v472
        %v1074 = vunpack.c.h.b16 %v472
        %v1075 = vunpack.c.l.b16 %v473
        %v1076 = vunpack.c.h.b16 %v473
        %v1077 = vunpack.c.l.b16 %v474
        %v1078 = vunpack.c.h.b16 %v474
        %v1079 = vunpack.c.l.b16 %v475
        %v1080 = vunpack.c.h.b16 %v475
        %v1081 = vunpack.c.l.b16 %v476
        %v1082 = vunpack.c.h.b16 %v476
        %v1083 = vunpack.c.l.b16 %v477
        %v1084 = vunpack.c.h.b16 %v477
        %v1085 = vunpack.c.l.b16 %v478
        %v1086 = vunpack.c.h.b16 %v478
        %v1087 = vunpack.c.l.b16 %v479
        %v1088 = vunpack.c.h.b16 %v479
        %v1089 = vunpack.c.l.b16 %v480
        %v1090 = vunpack.c.h.b16 %v480
        %v1091 = vpack.c.b16 %v703, %v699
        %v1092 = vpack.c.b16 %v704, %v700
        %v1093 = vpack.c.b16 %v705, %v701
        %v1094 = vpack.c.b16 %v706, %v702
        %v1095 = vpack.c.b16 %v711, %v707
        %v1096 = vpack.c.b16 %v712, %v708
        %v1097 = vpack.c.b16 %v713, %v709
        %v1098 = vpack.c.b16 %v714, %v710
        %v1099 = vpack.c.b16 %v719, %v715
        %v1100 = vpack.c.b16 %v720, %v716
        %v1101 = vpack.c.b16 %v721, %v717
        %v1102 = vpack.c.b16 %v722, %v718
        %v1103 = vpack.c.b16 %v727, %v723
        %v1104 = vpack.c.b16 %v728, %v724
        %v1105 = vpack.c.b16 %v729, %v725
        %v1106 = vpack.c.b16 %v730, %v726
        %v1107 = vpack.c.b16 %v735, %v731
        %v1108 = vpack.c.b16 %v736, %v732
        %v1109 = vpack.c.b16 %v737, %v733
        %v1110 = vpack.c.b16 %v738, %v734
        %v1111 = vpack.c.b16 %v743, %v739
        %v1112 = vpack.c.b16 %v744, %v740
        %v1113 = vpack.c.b16 %v745, %v741
        %v1114 = vpack.c.b16 %v746, %v742
        %v1115 = vpack.c.b16 %v751, %v747
        %v1116 = vpack.c.b16 %v752, %v748
        %v1117 = vpack.c.b16 %v753, %v749
        %v1118 = vpack.c.b16 %v754, %v750
        %v1119 = vpack.c.b16 %v759, %v755
        %v1120 = vpack.c.b16 %v760, %v756
        %v1121 = vpack.c.b16 %v761, %v757
        %v1122 = vpack.c.b16 %v762, %v758
        %v1123 = vpack.c.b16 %v767, %v763
        %v1124 = vpack.c.b16 %v768, %v764
        %v1125 = vpack.c.b16 %v769, %v765
        %v1126 = vpack.c.b16 %v770, %v766
        %v1127 = vpack.c.b16 %v775, %v771
        %v1128 = vpack.c.b16 %v776, %v772
        %v1129 = vpack.c.b16 %v777, %v773
        %v1130 = vpack.c.b16 %v778, %v774
        %v1131 = vpack.c.b16 %v783, %v779
        %v1132 = vpack.c.b16 %v784, %v780
        %v1133 = vpack.c.b16 %v785, %v781
        %v1134 = vpack.c.b16 %v786, %v782
        %v1135 = vpack.c.b16 %v791, %v787
        %v1136 = vpack.c.b16 %v792, %v788
        %v1137 = vpack.c.b16 %v793, %v789
        %v1138 = vpack.c.b16 %v794, %v790
        %v1139 = vpack.c.b16 %v799, %v795
        %v1140 = vpack.c.b16 %v800, %v796
        %v1141 = vpack.c.b16 %v801, %v797
        %v1142 = vpack.c.b16 %v802, %v798
        %v1143 = vpack.c.b16 %v807, %v803
        %v1144 = vpack.c.b16 %v808, %v804
        %v1145 = vpack.c.b16 %v809, %v805
        %v1146 = vpack.c.b16 %v810, %v806
        %v1147 = vpack.c.b16 %v815, %v811
        %v1148 = vpack.c.b16 %v816, %v812
        %v1149 = vpack.c.b16 %v817, %v813
        %v1150 = vpack.c.b16 %v818, %v814
        %v1151 = vpack.c.b16 %v823, %v819
        %v1152 = vpack.c.b16 %v824, %v820
        %v1153 = vpack.c.b16 %v825, %v821
        %v1154 = vpack.c.b16 %v826, %v822
        %v1155 = vpack.c.b16 %v831, %v827
        %v1156 = vpack.c.b16 %v832, %v828
        %v1157 = vpack.c.b16 %v833, %v829
        %v1158 = vpack.c.b16 %v834, %v830
        %v1159 = vpack.c.b16 %v839, %v835
        %v1160 = vpack.c.b16 %v840, %v836
        %v1161 = vpack.c.b16 %v841, %v837
        %v1162 = vpack.c.b16 %v842, %v838
        %v1163 = vpack.c.b16 %v847, %v843
        %v1164 = vpack.c.b16 %v848, %v844
        %v1165 = vpack.c.b16 %v849, %v845
        %v1166 = vpack.c.b16 %v850, %v846
        %v1167 = vpack.c.b16 %v855, %v851
        %v1168 = vpack.c.b16 %v856, %v852
        %v1169 = vpack.c.b16 %v857, %v853
        %v1170 = vpack.c.b16 %v858, %v854
        %v1171 = vpack.c.b16 %v863, %v859
        %v1172 = vpack.c.b16 %v864, %v860
        %v1173 = vpack.c.b16 %v865, %v861
        %v1174 = vpack.c.b16 %v866, %v862
        %v1175 = vpack.c.b16 %v871, %v867
        %v1176 = vpack.c.b16 %v872, %v868
        %v1177 = vpack.c.b16 %v873, %v869
        %v1178 = vpack.c.b16 %v874, %v870
        %v1179 = vpack.c.b16 %v879, %v875
        %v1180 = vpack.c.b16 %v880, %v876
        %v1181 = vpack.c.b16 %v881, %v877
        %v1182 = vpack.c.b16 %v882, %v878
        %v1183 = vpack.c.b16 %v887, %v883
        %v1184 = vpack.c.b16 %v888, %v884
        %v1185 = vpack.c.b16 %v889, %v885
        %v1186 = vpack.c.b16 %v890, %v886
        %v1187 = vpack.c.b16 %v895, %v891
        %v1188 = vpack.c.b16 %v896, %v892
        %v1189 = vpack.c.b16 %v897, %v893
        %v1190 = vpack.c.b16 %v898, %v894
        %v1191 = vpack.c.b16 %v903, %v899
        %v1192 = vpack.c.b16 %v904, %v900
        %v1193 = vpack.c.b16 %v905, %v901
        %v1194 = vpack.c.b16 %v906, %v902
        %v1195 = vpack.c.b16 %v911, %v907
        %v1196 = vpack.c.b16 %v912, %v908
        %v1197 = vpack.c.b16 %v913, %v909
        %v1198 = vpack.c.b16 %v914, %v910
        %v1199 = vpack.c.b16 %v919, %v915
        %v1200 = vpack.c.b16 %v920, %v916
        %v1201 = vpack.c.b16 %v921, %v917
        %v1202 = vpack.c.b16 %v922, %v918
        %v1203 = vpack.c.b16 %v927, %v923
        %v1204 = vpack.c.b16 %v928, %v924
        %v1205 = vpack.c.b16 %v929, %v925
        %v1206 = vpack.c.b16 %v930, %v926
        %v1207 = vpack.c.b16 %v935, %v931
        %v1208 = vpack.c.b16 %v936, %v932
        %v1209 = vpack.c.b16 %v937, %v933
        %v1210 = vpack.c.b16 %v938, %v934
        %v1211 = vpack.c.b16 %v943, %v939
        %v1212 = vpack.c.b16 %v944, %v940
        %v1213 = vpack.c.b16 %v945, %v941
        %v1214 = vpack.c.b16 %v946, %v942
        %v1215 = vpack.c.b16 %v951, %v947
        %v1216 = vpack.c.b16 %v952, %v948
        %v1217 = vpack.c.b16 %v953, %v949
        %v1218 = vpack.c.b16 %v954, %v950
        %v1219 = vpack.c.b16 %v959, %v955
        %v1220 = vpack.c.b16 %v960, %v956
        %v1221 = vpack.c.b16 %v961, %v957
        %v1222 = vpack.c.b16 %v962, %v958
        %v1223 = vpack.c.b16 %v967, %v963
        %v1224 = vpack.c.b16 %v968, %v964
        %v1225 = vpack.c.b16 %v969, %v965
        %v1226 = vpack.c.b16 %v970, %v966
        %v1227 = vpack.c.b16 %v975, %v971
        %v1228 = vpack.c.b16 %v976, %v972
        %v1229 = vpack.c.b16 %v977, %v973
        %v1230 = vpack.c.b16 %v978, %v974
        %v1231 = vpack.c.b16 %v983, %v979
        %v1232 = vpack.c.b16 %v984, %v980
        %v1233 = vpack.c.b16 %v985, %v981
        %v1234 = vpack.c.b16 %v986, %v982
        %v1235 = vpack.c.b16 %v991, %v987
        %v1236 = vpack.c.b16 %v992, %v988
        %v1237 = vpack.c.b16 %v993, %v989
        %v1238 = vpack.c.b16 %v994, %v990
        %v1239 = vpack.c.b16 %v999, %v995
        %v1240 = vpack.c.b16 %v1000, %v996
        %v1241 = vpack.c.b16 %v1001, %v997
        %v1242 = vpack.c.b16 %v1002, %v998
        %v1243 = vpack.c.b16 %v1007, %v1003
        %v1244 = vpack.c.b16 %v1008, %v1004
        %v1245 = vpack.c.b16 %v1009, %v1005
        %v1246 = vpack.c.b16 %v1010, %v1006
        %v1247 = vpack.c.b16 %v1015, %v1011
        %v1248 = vpack.c.b16 %v1016, %v1012
        %v1249 = vpack.c.b16 %v1017, %v1013
        %v1250 = vpack.c.b16 %v1018, %v1014
        %v1251 = vpack.c.b16 %v1023, %v1019
        %v1252 = vpack.c.b16 %v1024, %v1020
        %v1253 = vpack.c.b16 %v1025, %v1021
        %v1254 = vpack.c.b16 %v1026, %v1022
        %v1255 = vpack.c.b16 %v1031, %v1027
        %v1256 = vpack.c.b16 %v1032, %v1028
        %v1257 = vpack.c.b16 %v1033, %v1029
        %v1258 = vpack.c.b16 %v1034, %v1030
        %v1259 = vpack.c.b16 %v1039, %v1035
        %v1260 = vpack.c.b16 %v1040, %v1036
        %v1261 = vpack.c.b16 %v1041, %v1037
        %v1262 = vpack.c.b16 %v1042, %v1038
        %v1263 = vpack.c.b16 %v1047, %v1043
        %v1264 = vpack.c.b16 %v1048, %v1044
        %v1265 = vpack.c.b16 %v1049, %v1045
        %v1266 = vpack.c.b16 %v1050, %v1046
        %v1267 = vpack.c.b16 %v1055, %v1051
        %v1268 = vpack.c.b16 %v1056, %v1052
        %v1269 = vpack.c.b16 %v1057, %v1053
        %v1270 = vpack.c.b16 %v1058, %v1054
        %v1271 = vpack.c.b16 %v1063, %v1059
        %v1272 = vpack.c.b16 %v1064, %v1060
        %v1273 = vpack.c.b16 %v1065, %v1061
        %v1274 = vpack.c.b16 %v1066, %v1062
        %v1275 = vpack.c.b16 %v1071, %v1067
        %v1276 = vpack.c.b16 %v1072, %v1068
        %v1277 = vpack.c.b16 %v1073, %v1069
        %v1278 = vpack.c.b16 %v1074, %v1070
        %v1279 = vpack.c.b16 %v1079, %v1075
        %v1280 = vpack.c.b16 %v1080, %v1076
        %v1281 = vpack.c.b16 %v1081, %v1077
        %v1282 = vpack.c.b16 %v1082, %v1078
        %v1283 = vpack.c.b16 %v1087, %v1083
        %v1284 = vpack.c.b16 %v1088, %v1084
        %v1285 = vpack.c.b16 %v1089, %v1085
        %v1286 = vpack.c.b16 %v1090, %v1086
        %vm1483 = vcmask 130048
        %v1485 = vsel %vm1483, %v284, 0
        %1487 = vmatprep.subr.bf16.mxu0 %v1092
        %1488 = vmatpush1.bf16.msra.mxu0 %v1091
        %1489 = vmatprep.subr.bf16.mxu0 %v1096
        %1490 = vmatpush1.bf16.msra.mxu0 %v1095
        %1491 = vmatprep.subr.bf16.mxu0 %v1100
        %1492 = vmatpush1.bf16.msra.mxu0 %v1099
        %1493 = vmatprep.subr.bf16.mxu0 %v1104
        %1494 = vmatpush1.bf16.msra.mxu0 %v1103
        %1495 = vmatprep.subr.bf16.mxu0 %v1108
        %1496 = vmatpush1.bf16.msra.mxu0 %v1107
        %1497 = vmatprep.subr.bf16.mxu0 %v1112
        %1498 = vmatpush1.bf16.msra.mxu0 %v1111
        %1499 = vmatprep.subr.bf16.mxu0 %v1116
        %1500 = vmatpush1.bf16.msra.mxu0 %v1115
        %1501 = vmatprep.subr.bf16.mxu0 %v1120
        %1502 = vmatpush1.bf16.msra.mxu0 %v1119
        %1503 = vmatprep.subr.bf16.mxu0 %v1124
        %1504 = vmatpush1.bf16.msra.mxu0 %v1123
        %1505 = vmatprep.subr.bf16.mxu0 %v1128
        %1506 = vmatpush1.bf16.msra.mxu0 %v1127
        %1507 = vmatprep.subr.bf16.mxu0 %v1132
        %1508 = vmatpush1.bf16.msra.mxu0 %v1131
        %1509 = vmatprep.subr.bf16.mxu0 %v1136
        %1510 = vmatpush1.bf16.msra.mxu0 %v1135
        %1511 = vmatprep.subr.bf16.mxu0 %v1140
        %1512 = vmatpush1.bf16.msra.mxu0 %v1139
        %1513 = vmatprep.subr.bf16.mxu0 %v1144
        %1514 = vmatpush1.bf16.msra.mxu0 %v1143
        %1515 = vmatprep.subr.bf16.mxu0 %v1148
        %1516 = vmatpush1.bf16.msra.mxu0 %v1147
        %1517 = vmatprep.subr.bf16.mxu0 %v1152
        %1518 = vmatpush1.bf16.msra.mxu0 %v1151
        %1519 = vmatprep.mubr.bf16.mxu0 %v279
        %1520 = vmatmul.mubr.bf16.gmra.mrb[0].mxu0 %v278
        %v1521 = vpop.f32.mrb[0].mxu0
        %v1522 = vadd.f32 %v486, %v1521
        %v1523 = vpop.f32.mrb[0].mxu0
        %v1524 = vadd.f32 %v490, %v1523
        %v1525 = vpop.f32.mrb[0].mxu0
        %v1526 = vpop.f32.mrb[0].mxu0
        %1527 = vdwg.mxu0
        %1528 = vmatprep.subr.bf16.mxu0 %v1156
        %1529 = vmatpush1.bf16.msra.mxu0 %v1155
        %1530 = vmatprep.subr.bf16.mxu0 %v1160
        %1531 = vmatpush1.bf16.msra.mxu0 %v1159
        %1532 = vmatprep.subr.bf16.mxu0 %v1164
        %1533 = vmatpush1.bf16.msra.mxu0 %v1163
        %1534 = vmatprep.subr.bf16.mxu0 %v1168
        %1535 = vmatpush1.bf16.msra.mxu0 %v1167
        %1536 = vmatprep.subr.bf16.mxu0 %v1172
        %1537 = vmatpush1.bf16.msra.mxu0 %v1171
        %1538 = vmatprep.subr.bf16.mxu0 %v1176
        %1539 = vmatpush1.bf16.msra.mxu0 %v1175
        %1540 = vmatprep.subr.bf16.mxu0 %v1180
        %1541 = vmatpush1.bf16.msra.mxu0 %v1179
        %1542 = vmatprep.subr.bf16.mxu0 %v1184
        %1543 = vmatpush1.bf16.msra.mxu0 %v1183
        %1544 = vmatprep.subr.bf16.mxu0 %v1188
        %1545 = vmatpush1.bf16.msra.mxu0 %v1187
        %1546 = vmatprep.subr.bf16.mxu0 %v1192
        %1547 = vmatpush1.bf16.msra.mxu0 %v1191
        %1548 = vmatprep.subr.bf16.mxu0 %v1196
        %1549 = vmatpush1.bf16.msra.mxu0 %v1195
        %1550 = vmatprep.subr.bf16.mxu0 %v1200
        %1551 = vmatpush1.bf16.msra.mxu0 %v1199
        %1552 = vmatprep.subr.bf16.mxu0 %v1204
        %1553 = vmatpush1.bf16.msra.mxu0 %v1203
        %1554 = vmatprep.subr.bf16.mxu0 %v1208
        %1555 = vmatpush1.bf16.msra.mxu0 %v1207
        %1556 = vmatprep.subr.bf16.mxu0 %v1212
        %1557 = vmatpush1.bf16.msra.mxu0 %v1211
        %1558 = vmatprep.subr.bf16.mxu0 %v1216
        %1559 = vmatpush1.bf16.msra.mxu0 %v1215
        %1560 = vmatprep.mubr.bf16.mxu0 %v281
        %1561 = vmatmul.mubr.bf16.gmra.mrb[0].mxu0 %v280
        %v1562 = vpop.f32.mrb[0].mxu0
        %v1563 = vadd.f32 %v1522, %v1562
        %v1564 = vpop.f32.mrb[0].mxu0
        %v1565 = vadd.f32 %v1524, %v1564
        %v1566 = vpop.f32.mrb[0].mxu0
        %v1567 = vpop.f32.mrb[0].mxu0
        %1568 = vdwg.mxu0
        %1569 = vmatprep.subr.bf16.mxu0 %v1220
        %1570 = vmatpush1.bf16.msra.mxu0 %v1219
        %1571 = vmatprep.subr.bf16.mxu0 %v1224
        %1572 = vmatpush1.bf16.msra.mxu0 %v1223
        %1573 = vmatprep.subr.bf16.mxu0 %v1228
        %1574 = vmatpush1.bf16.msra.mxu0 %v1227
        %1575 = vmatprep.subr.bf16.mxu0 %v1232
        %1576 = vmatpush1.bf16.msra.mxu0 %v1231
        %1577 = vmatprep.subr.bf16.mxu0 %v1236
        %1578 = vmatpush1.bf16.msra.mxu0 %v1235
        %1579 = vmatprep.subr.bf16.mxu0 %v1240
        %1580 = vmatpush1.bf16.msra.mxu0 %v1239
        %1581 = vmatprep.subr.bf16.mxu0 %v1244
        %1582 = vmatpush1.bf16.msra.mxu0 %v1243
        %1583 = vmatprep.subr.bf16.mxu0 %v1248
        %1584 = vmatpush1.bf16.msra.mxu0 %v1247
        %1585 = vmatprep.subr.bf16.mxu0 %v1252
        %1586 = vmatpush1.bf16.msra.mxu0 %v1251
        %1587 = vmatprep.subr.bf16.mxu0 %v1256
        %1588 = vmatpush1.bf16.msra.mxu0 %v1255
        %1589 = vmatprep.subr.bf16.mxu0 %v1260
        %1590 = vmatpush1.bf16.msra.mxu0 %v1259
        %1591 = vmatprep.subr.bf16.mxu0 %v1264
        %1592 = vmatpush1.bf16.msra.mxu0 %v1263
        %1593 = vmatprep.subr.bf16.mxu0 %v1268
        %1594 = vmatpush1.bf16.msra.mxu0 %v1267
        %1595 = vmatprep.subr.bf16.mxu0 %v1272
        %1596 = vmatpush1.bf16.msra.mxu0 %v1271
        %1597 = vmatprep.subr.bf16.mxu0 %v1276
        %1598 = vmatpush1.bf16.msra.mxu0 %v1275
        %1599 = vmatprep.subr.bf16.mxu0 %v1280
        %1600 = vmatpush1.bf16.msra.mxu0 %v1279
        %1601 = vmatprep.mubr.bf16.mxu0 %v283
        %1602 = vmatmul.mubr.bf16.gmra.mrb[0].mxu0 %v282
        %v1603 = vpop.f32.mrb[0].mxu0
        %v1604 = vadd.f32 %v1563, %v1603
        %v1605 = vpop.f32.mrb[0].mxu0
        %v1606 = vadd.f32 %v1565, %v1605
        %v1607 = vpop.f32.mrb[0].mxu0
        %v1608 = vpop.f32.mrb[0].mxu0
        %1609 = vdwg.mxu0
        %1610 = vmatprep.subr.bf16.mxu0 %v1284
        %1611 = vmatpush1.bf16.msra.mxu0 %v1283
        %1612 = vmatprep.subr.bf16.mxu0 0
        %1613 = vmatpush1.bf16.msra.mxu0 0
        %1614 = vmatprep.subr.bf16.mxu0 0
        %1615 = vmatpush1.bf16.msra.mxu0 0
        %1616 = vmatprep.subr.bf16.mxu0 0
        %1617 = vmatpush1.bf16.msra.mxu0 0
        %1618 = vmatprep.subr.bf16.mxu0 0
        %1619 = vmatpush1.bf16.msra.mxu0 0
        %1620 = vmatprep.subr.bf16.mxu0 0
        %1621 = vmatpush1.bf16.msra.mxu0 0
        %1622 = vmatprep.subr.bf16.mxu0 0
        %1623 = vmatpush1.bf16.msra.mxu0 0
        %1624 = vmatprep.subr.bf16.mxu0 0
        %1625 = vmatpush1.bf16.msra.mxu0 0
        %1626 = vmatprep.subr.bf16.mxu0 0
        %1627 = vmatpush1.bf16.msra.mxu0 0
        %1628 = vmatprep.subr.bf16.mxu0 0
        %1629 = vmatpush1.bf16.msra.mxu0 0
        %1630 = vmatprep.subr.bf16.mxu0 0
        %1631 = vmatpush1.bf16.msra.mxu0 0
        %1632 = vmatprep.subr.bf16.mxu0 0
        %1633 = vmatpush1.bf16.msra.mxu0 0
        %1634 = vmatprep.subr.bf16.mxu0 0
        %1635 = vmatpush1.bf16.msra.mxu0 0
        %1636 = vmatprep.subr.bf16.mxu0 0
        %1637 = vmatpush1.bf16.msra.mxu0 0
        %1638 = vmatprep.subr.bf16.mxu0 0
        %1639 = vmatpush1.bf16.msra.mxu0 0
        %1640 = vmatprep.subr.bf16.mxu0 0
        %1641 = vmatpush1.bf16.msra.mxu0 0
        %1642 = vmatprep.mubr.bf16.mxu0 0
        %1643 = vmatmul.mubr.bf16.gmra.mrb[0].mxu0 %v1485
        %v1644 = vpop.f32.mrb[0].mxu0
        %v1645 = vadd.f32 %v1604, %v1644
        %v1646 = vpop.f32.mrb[0].mxu0
        %v1647 = vadd.f32 %v1606, %v1646
        %v1648 = vpop.f32.mrb[0].mxu0
        %v1649 = vpop.f32.mrb[0].mxu0
        %1650 = vdwg.mxu0
        %1651 = vmatprep.subr.bf16.mxu0 %v1094
        %1652 = vmatpush1.bf16.msra.mxu0 %v1093
        %1653 = vmatprep.subr.bf16.mxu0 %v1098
        %1654 = vmatpush1.bf16.msra.mxu0 %v1097
        %1655 = vmatprep.subr.bf16.mxu0 %v1102
        %1656 = vmatpush1.bf16.msra.mxu0 %v1101
        %1657 = vmatprep.subr.bf16.mxu0 %v1106
        %1658 = vmatpush1.bf16.msra.mxu0 %v1105
        %1659 = vmatprep.subr.bf16.mxu0 %v1110
        %1660 = vmatpush1.bf16.msra.mxu0 %v1109
        %1661 = vmatprep.subr.bf16.mxu0 %v1114
        %1662 = vmatpush1.bf16.msra.mxu0 %v1113
        %1663 = vmatprep.subr.bf16.mxu0 %v1118
        %1664 = vmatpush1.bf16.msra.mxu0 %v1117
        %1665 = vmatprep.subr.bf16.mxu0 %v1122
        %1666 = vmatpush1.bf16.msra.mxu0 %v1121
        %1667 = vmatprep.subr.bf16.mxu0 %v1126
        %1668 = vmatpush1.bf16.msra.mxu0 %v1125
        %1669 = vmatprep.subr.bf16.mxu0 %v1130
        %1670 = vmatpush1.bf16.msra.mxu0 %v1129
        %1671 = vmatprep.subr.bf16.mxu0 %v1134
        %1672 = vmatpush1.bf16.msra.mxu0 %v1133
        %1673 = vmatprep.subr.bf16.mxu0 %v1138
        %1674 = vmatpush1.bf16.msra.mxu0 %v1137
        %1675 = vmatprep.subr.bf16.mxu0 %v1142
        %1676 = vmatpush1.bf16.msra.mxu0 %v1141
        %1677 = vmatprep.subr.bf16.mxu0 %v1146
        %1678 = vmatpush1.bf16.msra.mxu0 %v1145
        %1679 = vmatprep.subr.bf16.mxu0 %v1150
        %1680 = vmatpush1.bf16.msra.mxu0 %v1149
        %1681 = vmatprep.subr.bf16.mxu0 %v1154
        %1682 = vmatpush1.bf16.msra.mxu0 %v1153
        %1683 = vmatprep.mubr.bf16.mxu0 %v279
        %1684 = vmatmul.mubr.bf16.gmra.mrb[0].mxu0 %v278
        %v1685 = vpop.f32.mrb[0].mxu0
        %v1686 = vadd.f32 %v494, %v1685
        %v1687 = vpop.f32.mrb[0].mxu0
        %v1688 = vadd.f32 %v498, %v1687
        %v1689 = vpop.f32.mrb[0].mxu0
        %v1690 = vpop.f32.mrb[0].mxu0
        %1691 = vdwg.mxu0
        %1692 = vmatprep.subr.bf16.mxu0 %v1158
        %1693 = vmatpush1.bf16.msra.mxu0 %v1157
        %1694 = vmatprep.subr.bf16.mxu0 %v1162
        %1695 = vmatpush1.bf16.msra.mxu0 %v1161
        %1696 = vmatprep.subr.bf16.mxu0 %v1166
        %1697 = vmatpush1.bf16.msra.mxu0 %v1165
        %1698 = vmatprep.subr.bf16.mxu0 %v1170
        %1699 = vmatpush1.bf16.msra.mxu0 %v1169
        %1700 = vmatprep.subr.bf16.mxu0 %v1174
        %1701 = vmatpush1.bf16.msra.mxu0 %v1173
        %1702 = vmatprep.subr.bf16.mxu0 %v1178
        %1703 = vmatpush1.bf16.msra.mxu0 %v1177
        %1704 = vmatprep.subr.bf16.mxu0 %v1182
        %1705 = vmatpush1.bf16.msra.mxu0 %v1181
        %1706 = vmatprep.subr.bf16.mxu0 %v1186
        %1707 = vmatpush1.bf16.msra.mxu0 %v1185
        %1708 = vmatprep.subr.bf16.mxu0 %v1190
        %1709 = vmatpush1.bf16.msra.mxu0 %v1189
        %1710 = vmatprep.subr.bf16.mxu0 %v1194
        %1711 = vmatpush1.bf16.msra.mxu0 %v1193
        %1712 = vmatprep.subr.bf16.mxu0 %v1198
        %1713 = vmatpush1.bf16.msra.mxu0 %v1197
        %1714 = vmatprep.subr.bf16.mxu0 %v1202
        %1715 = vmatpush1.bf16.msra.mxu0 %v1201
        %1716 = vmatprep.subr.bf16.mxu0 %v1206
        %1717 = vmatpush1.bf16.msra.mxu0 %v1205
        %1718 = vmatprep.subr.bf16.mxu0 %v1210
        %1719 = vmatpush1.bf16.msra.mxu0 %v1209
        %1720 = vmatprep.subr.bf16.mxu0 %v1214
        %1721 = vmatpush1.bf16.msra.mxu0 %v1213
        %1722 = vmatprep.subr.bf16.mxu0 %v1218
        %1723 = vmatpush1.bf16.msra.mxu0 %v1217
        %1724 = vmatprep.mubr.bf16.mxu0 %v281
        %1725 = vmatmul.mubr.bf16.gmra.mrb[0].mxu0 %v280
        %v1726 = vpop.f32.mrb[0].mxu0
        %v1727 = vadd.f32 %v1686, %v1726
        %v1728 = vpop.f32.mrb[0].mxu0
        %v1729 = vadd.f32 %v1688, %v1728
        %v1730 = vpop.f32.mrb[0].mxu0
        %v1731 = vpop.f32.mrb[0].mxu0
        %1732 = vdwg.mxu0
        %1733 = vmatprep.subr.bf16.mxu0 %v1222
        %1734 = vmatpush1.bf16.msra.mxu0 %v1221
        %1735 = vmatprep.subr.bf16.mxu0 %v1226
        %1736 = vmatpush1.bf16.msra.mxu0 %v1225
        %1737 = vmatprep.subr.bf16.mxu0 %v1230
        %1738 = vmatpush1.bf16.msra.mxu0 %v1229
        %1739 = vmatprep.subr.bf16.mxu0 %v1234
        %1740 = vmatpush1.bf16.msra.mxu0 %v1233
        %1741 = vmatprep.subr.bf16.mxu0 %v1238
        %1742 = vmatpush1.bf16.msra.mxu0 %v1237
        %1743 = vmatprep.subr.bf16.mxu0 %v1242
        %1744 = vmatpush1.bf16.msra.mxu0 %v1241
        %1745 = vmatprep.subr.bf16.mxu0 %v1246
        %1746 = vmatpush1.bf16.msra.mxu0 %v1245
        %1747 = vmatprep.subr.bf16.mxu0 %v1250
        %1748 = vmatpush1.bf16.msra.mxu0 %v1249
        %1749 = vmatprep.subr.bf16.mxu0 %v1254
        %1750 = vmatpush1.bf16.msra.mxu0 %v1253
        %1751 = vmatprep.subr.bf16.mxu0 %v1258
        %1752 = vmatpush1.bf16.msra.mxu0 %v1257
        %1753 = vmatprep.subr.bf16.mxu0 %v1262
        %1754 = vmatpush1.bf16.msra.mxu0 %v1261
        %1755 = vmatprep.subr.bf16.mxu0 %v1266
        %1756 = vmatpush1.bf16.msra.mxu0 %v1265
        %1757 = vmatprep.subr.bf16.mxu0 %v1270
        %1758 = vmatpush1.bf16.msra.mxu0 %v1269
        %1759 = vmatprep.subr.bf16.mxu0 %v1274
        %1760 = vmatpush1.bf16.msra.mxu0 %v1273
        %1761 = vmatprep.subr.bf16.mxu0 %v1278
        %1762 = vmatpush1.bf16.msra.mxu0 %v1277
        %1763 = vmatprep.subr.bf16.mxu0 %v1282
        %1764 = vmatpush1.bf16.msra.mxu0 %v1281
        %1765 = vmatprep.mubr.bf16.mxu0 %v283
        %1766 = vmatmul.mubr.bf16.gmra.mrb[0].mxu0 %v282
        %v1767 = vpop.f32.mrb[0].mxu0
        %v1768 = vadd.f32 %v1727, %v1767
        %v1769 = vpop.f32.mrb[0].mxu0
        %v1770 = vadd.f32 %v1729, %v1769
        %v1771 = vpop.f32.mrb[0].mxu0
        %v1772 = vpop.f32.mrb[0].mxu0
        %1773 = vdwg.mxu0
        %1774 = vmatprep.subr.bf16.mxu0 %v1286
        %1775 = vmatpush1.bf16.msra.mxu0 %v1285
        %1776 = vmatprep.subr.bf16.mxu0 0
        %1777 = vmatpush1.bf16.msra.mxu0 0
        %1778 = vmatprep.subr.bf16.mxu0 0
        %1779 = vmatpush1.bf16.msra.mxu0 0
        %1780 = vmatprep.subr.bf16.mxu0 0
        %1781 = vmatpush1.bf16.msra.mxu0 0
        %1782 = vmatprep.subr.bf16.mxu0 0
        %1783 = vmatpush1.bf16.msra.mxu0 0
        %1784 = vmatprep.subr.bf16.mxu0 0
        %1785 = vmatpush1.bf16.msra.mxu0 0
        %1786 = vmatprep.subr.bf16.mxu0 0
        %1787 = vmatpush1.bf16.msra.mxu0 0
        %1788 = vmatprep.subr.bf16.mxu0 0
        %1789 = vmatpush1.bf16.msra.mxu0 0
        %1790 = vmatprep.subr.bf16.mxu0 0
        %1791 = vmatpush1.bf16.msra.mxu0 0
        %1792 = vmatprep.subr.bf16.mxu0 0
        %1793 = vmatpush1.bf16.msra.mxu0 0
        %1794 = vmatprep.subr.bf16.mxu0 0
        %1795 = vmatpush1.bf16.msra.mxu0 0
        %1796 = vmatprep.subr.bf16.mxu0 0
        %1797 = vmatpush1.bf16.msra.mxu0 0
        %1798 = vmatprep.subr.bf16.mxu0 0
        %1799 = vmatpush1.bf16.msra.mxu0 0
        %1800 = vmatprep.subr.bf16.mxu0 0
        %1801 = vmatpush1.bf16.msra.mxu0 0
        %1802 = vmatprep.subr.bf16.mxu0 0
        %1803 = vmatpush1.bf16.msra.mxu0 0
        %1804 = vmatprep.subr.bf16.mxu0 0
        %1805 = vmatpush1.bf16.msra.mxu0 0
        %1806 = vmatprep.mubr.bf16.mxu0 0
        %1807 = vmatmul.mubr.bf16.gmra.mrb[0].mxu0 %v1485
        %v1808 = vpop.f32.mrb[0].mxu0
        %v1809 = vadd.f32 %v1768, %v1808
        %v1810 = vpop.f32.mrb[0].mxu0
        %v1811 = vadd.f32 %v1770, %v1810
        %v1812 = vpop.f32.mrb[0].mxu0
        %v1813 = vpop.f32.mrb[0].mxu0
        %1814 = vdwg.mxu0
        %v1815 = vmax.f32 %v1645, 0.0
        %v1816 = vmax.f32 %v1647, 0.0
        %v1817 = vmax.f32 %v1809, 0.0
        %v1818 = vmax.f32 %v1811, 0.0
        %v1819 = vpack.c.bf16 %v1815, %v1815
        %v1820 = vpack.c.bf16 %v1816, %v1816
        %v1821 = vpack.c.bf16 %v1817, %v1817
        %v1822 = vpack.c.bf16 %v1818, %v1818
        %v1823 = vld [vmem:[#allocation7] sm:$0xf]
        %v1824 = vld [vmem:[#allocation7 + $0x4] sm:$0xf]
        %v1825 = vld [vmem:[#allocation7 + $0x8] sm:$0xf]
        %v1826 = vld [vmem:[#allocation7 + $0xc] sm:$0xf]
        %v1827 = vld [vmem:[#allocation7 + $0x10] sm:$0xf]
        %v1828 = vld [vmem:[#allocation7 + $0x14] sm:$0xf]
        %v1829 = vld [vmem:[#allocation7 + $0x18] sm:$0xf]
        %v1830 = vld [vmem:[#allocation7 + $0x1c] sm:$0xf]
        %v1831 = vld [vmem:[#allocation7 + $0x20] sm:$0xf]
        %v1832 = vld [vmem:[#allocation7 + $0x24] sm:$0xf]
        %v1833 = vld [vmem:[#allocation7 + $0x28] sm:$0xf]
        %v1834 = vld [vmem:[#allocation7 + $0x2c] sm:$0xf]
        %v1835 = vld [vmem:[#allocation7 + $0x30] sm:$0xf]
        %v1836 = vld [vmem:[#allocation7 + $0x34] sm:$0xf]
        %v1837 = vld [vmem:[#allocation7 + $0x38] sm:$0xf]
        %v1838 = vld [vmem:[#allocation7 + $0x3c] sm:$0xf]
        %v1839 = vld [vmem:[#allocation7 + $0x40] sm:$0xf]
        %v1840 = vld [vmem:[#allocation7 + $0x44] sm:$0xf]
        %v1841 = vld [vmem:[#allocation7 + $0x48] sm:$0xf]
        %v1842 = vld [vmem:[#allocation7 + $0x4c] sm:$0xf]
        %v1843 = vld [vmem:[#allocation7 + $0x50] sm:$0xf]
        %v1844 = vld [vmem:[#allocation7 + $0x54] sm:$0xf]
        %v1845 = vld [vmem:[#allocation7 + $0x58] sm:$0xf]
        %v1846 = vld [vmem:[#allocation7 + $0x5c] sm:$0xf]
        %v1847 = vld [vmem:[#allocation7 + $0x60] sm:$0xf]
        %v1848 = vld [vmem:[#allocation7 + $0x64] sm:$0xf]
        %v1849 = vld [vmem:[#allocation7 + $0x68] sm:$0xf]
        %v1850 = vld [vmem:[#allocation7 + $0x6c] sm:$0xf]
        %v1851 = vld [vmem:[#allocation7 + $0x70] sm:$0xf]
        %v1852 = vld [vmem:[#allocation7 + $0x74] sm:$0xf]
        %v1853 = vld [vmem:[#allocation7 + $0x78] sm:$0xf]
        %v1854 = vld [vmem:[#allocation7 + $0x7c] sm:$0xf]
        %v1855 = vld [vmem:[#allocation7 + $0x80] sm:$0xf]
        %v1856 = vld [vmem:[#allocation7 + $0x84] sm:$0xf]
        %v1857 = vld [vmem:[#allocation7 + $0x88] sm:$0xf]
        %v1858 = vld [vmem:[#allocation7 + $0x8c] sm:$0xf]
        %v1859 = vld [vmem:[#allocation7 + $0x90] sm:$0xf]
        %v1860 = vld [vmem:[#allocation7 + $0x94] sm:$0xf]
        %v1861 = vld [vmem:[#allocation7 + $0x98] sm:$0xf]
        %v1862 = vld [vmem:[#allocation7 + $0x9c] sm:$0xf]
        %v1863 = vld [vmem:[#allocation7 + $0xa0] sm:$0xf]
        %v1864 = vld [vmem:[#allocation7 + $0xa4] sm:$0xf]
        %v1865 = vld [vmem:[#allocation7 + $0xa8] sm:$0xf]
        %v1866 = vld [vmem:[#allocation7 + $0xac] sm:$0xf]
        %v1867 = vld [vmem:[#allocation7 + $0xb0] sm:$0xf]
        %v1868 = vld [vmem:[#allocation7 + $0xb4] sm:$0xf]
        %v1869 = vld [vmem:[#allocation7 + $0xb8] sm:$0xf]
        %v1870 = vld [vmem:[#allocation7 + $0xbc] sm:$0xf]
        %v1871 = vld [vmem:[#allocation7 + $0xc0] sm:$0xf]
        %v1872 = vld [vmem:[#allocation7 + $0xc4] sm:$0xf]
        %v1873 = vld [vmem:[#allocation7 + $0xc8] sm:$0xf]
        %v1874 = vld [vmem:[#allocation7 + $0xcc] sm:$0xf]
        %v1875 = vld [vmem:[#allocation7 + $0xd0] sm:$0xf]
        %v1876 = vld [vmem:[#allocation7 + $0xd4] sm:$0xf]
        %v1877 = vld [vmem:[#allocation7 + $0xd8] sm:$0xf]
        %v1878 = vld [vmem:[#allocation7 + $0xdc] sm:$0xf]
        %v1879 = vld [vmem:[#allocation7 + $0xe0] sm:$0xf]
        %v1880 = vld [vmem:[#allocation7 + $0xe4] sm:$0xf]
        %v1881 = vld [vmem:[#allocation7 + $0xe8] sm:$0xf]
        %v1882 = vld [vmem:[#allocation7 + $0xec] sm:$0xf]
        %v1883 = vld [vmem:[#allocation7 + $0xf0] sm:$0xf]
        %v1884 = vld [vmem:[#allocation7 + $0xf4] sm:$0xf]
        %v1885 = vld [vmem:[#allocation7 + $0xf8] sm:$0xf]
        %v1886 = vld [vmem:[#allocation7 + $0xfc] sm:$0xf]
        %v1887 = vld [vmem:[%s4] sm:$0x1]
        %v1889 = vlaneseq
        %v1890 = vshrl.u32 %v1889, 7
        %v1891 = vsub.s32 0, %v1890
        %v1892 = vrot.slane %v1887, %v1891
        %v1958 = vunpack.c.l.b16 %v1823
        %v1959 = vunpack.c.l.b16 %v1824
        %v1960 = vunpack.c.l.b16 %v1825
        %v1961 = vunpack.c.l.b16 %v1826
        %v1962 = vunpack.c.l.b16 %v1827
        %v1963 = vunpack.c.l.b16 %v1828
        %v1964 = vunpack.c.l.b16 %v1829
        %v1965 = vunpack.c.l.b16 %v1830
        %v1966 = vunpack.c.l.b16 %v1831
        %v1967 = vunpack.c.l.b16 %v1832
        %v1968 = vunpack.c.l.b16 %v1833
        %v1969 = vunpack.c.l.b16 %v1834
        %v1970 = vunpack.c.l.b16 %v1835
        %v1971 = vunpack.c.l.b16 %v1836
        %v1972 = vunpack.c.l.b16 %v1837
        %v1973 = vunpack.c.l.b16 %v1838
        %v1974 = vunpack.c.l.b16 %v1839
        %v1975 = vunpack.c.l.b16 %v1840
        %v1976 = vunpack.c.l.b16 %v1841
        %v1977 = vunpack.c.l.b16 %v1842
        %v1978 = vunpack.c.l.b16 %v1843
        %v1979 = vunpack.c.l.b16 %v1844
        %v1980 = vunpack.c.l.b16 %v1845
        %v1981 = vunpack.c.l.b16 %v1846
        %v1982 = vunpack.c.l.b16 %v1847
        %v1983 = vunpack.c.l.b16 %v1848
        %v1984 = vunpack.c.l.b16 %v1849
        %v1985 = vunpack.c.l.b16 %v1850
        %v1986 = vunpack.c.l.b16 %v1851
        %v1987 = vunpack.c.l.b16 %v1852
        %v1988 = vunpack.c.l.b16 %v1853
        %v1989 = vunpack.c.l.b16 %v1854
        %v1990 = vunpack.c.l.b16 %v1855
        %v1991 = vunpack.c.l.b16 %v1856
        %v1992 = vunpack.c.l.b16 %v1857
        %v1993 = vunpack.c.l.b16 %v1858
        %v1994 = vunpack.c.l.b16 %v1859
        %v1995 = vunpack.c.l.b16 %v1860
        %v1996 = vunpack.c.l.b16 %v1861
        %v1997 = vunpack.c.l.b16 %v1862
        %v1998 = vunpack.c.l.b16 %v1863
        %v1999 = vunpack.c.l.b16 %v1864
        %v2000 = vunpack.c.l.b16 %v1865
        %v2001 = vunpack.c.l.b16 %v1866
        %v2002 = vunpack.c.l.b16 %v1867
        %v2003 = vunpack.c.l.b16 %v1868
        %v2004 = vunpack.c.l.b16 %v1869
        %v2005 = vunpack.c.l.b16 %v1870
        %v2006 = vunpack.c.l.b16 %v1871
        %v2007 = vunpack.c.l.b16 %v1872
        %v2008 = vunpack.c.l.b16 %v1873
        %v2009 = vunpack.c.l.b16 %v1874
        %v2010 = vunpack.c.l.b16 %v1875
        %v2011 = vunpack.c.l.b16 %v1876
        %v2012 = vunpack.c.l.b16 %v1877
        %v2013 = vunpack.c.l.b16 %v1878
        %v2014 = vunpack.c.l.b16 %v1879
        %v2015 = vunpack.c.l.b16 %v1880
        %v2016 = vunpack.c.l.b16 %v1881
        %v2017 = vunpack.c.l.b16 %v1882
        %v2018 = vunpack.c.l.b16 %v1883
        %v2019 = vunpack.c.l.b16 %v1884
        %v2020 = vunpack.c.l.b16 %v1885
        %v2021 = vunpack.c.l.b16 %v1886
        %v2022 = vpack.c.b16 %v1959, %v1958
        %v2023 = vpack.c.b16 %v1961, %v1960
        %v2024 = vpack.c.b16 %v1963, %v1962
        %v2025 = vpack.c.b16 %v1965, %v1964
        %v2026 = vpack.c.b16 %v1967, %v1966
        %v2027 = vpack.c.b16 %v1969, %v1968
        %v2028 = vpack.c.b16 %v1971, %v1970
        %v2029 = vpack.c.b16 %v1973, %v1972
        %v2030 = vpack.c.b16 %v1975, %v1974
        %v2031 = vpack.c.b16 %v1977, %v1976
        %v2032 = vpack.c.b16 %v1979, %v1978
        %v2033 = vpack.c.b16 %v1981, %v1980
        %v2034 = vpack.c.b16 %v1983, %v1982
        %v2035 = vpack.c.b16 %v1985, %v1984
        %v2036 = vpack.c.b16 %v1987, %v1986
        %v2037 = vpack.c.b16 %v1989, %v1988
        %v2038 = vpack.c.b16 %v1991, %v1990
        %v2039 = vpack.c.b16 %v1993, %v1992
        %v2040 = vpack.c.b16 %v1995, %v1994
        %v2041 = vpack.c.b16 %v1997, %v1996
        %v2042 = vpack.c.b16 %v1999, %v1998
        %v2043 = vpack.c.b16 %v2001, %v2000
        %v2044 = vpack.c.b16 %v2003, %v2002
        %v2045 = vpack.c.b16 %v2005, %v2004
        %v2046 = vpack.c.b16 %v2007, %v2006
        %v2047 = vpack.c.b16 %v2009, %v2008
        %v2048 = vpack.c.b16 %v2011, %v2010
        %v2049 = vpack.c.b16 %v2013, %v2012
        %v2050 = vpack.c.b16 %v2015, %v2014
        %v2051 = vpack.c.b16 %v2017, %v2016
        %v2052 = vpack.c.b16 %v2019, %v2018
        %v2053 = vpack.c.b16 %v2021, %v2020
        %2086 = vmatprep.subr.bf16.mxu0 0
        %2087 = vmatpush1.bf16.msra.mxu0 %v2022
        %2088 = vmatprep.subr.bf16.mxu0 0
        %2089 = vmatpush1.bf16.msra.mxu0 %v2023
        %2090 = vmatprep.subr.bf16.mxu0 0
        %2091 = vmatpush1.bf16.msra.mxu0 %v2024
        %2092 = vmatprep.subr.bf16.mxu0 0
        %2093 = vmatpush1.bf16.msra.mxu0 %v2025
        %2094 = vmatprep.subr.bf16.mxu0 0
        %2095 = vmatpush1.bf16.msra.mxu0 %v2026
        %2096 = vmatprep.subr.bf16.mxu0 0
        %2097 = vmatpush1.bf16.msra.mxu0 %v2027
        %2098 = vmatprep.subr.bf16.mxu0 0
        %2099 = vmatpush1.bf16.msra.mxu0 %v2028
        %2100 = vmatprep.subr.bf16.mxu0 0
        %2101 = vmatpush1.bf16.msra.mxu0 %v2029
        %2102 = vmatprep.subr.bf16.mxu0 0
        %2103 = vmatpush1.bf16.msra.mxu0 %v2030
        %2104 = vmatprep.subr.bf16.mxu0 0
        %2105 = vmatpush1.bf16.msra.mxu0 %v2031
        %2106 = vmatprep.subr.bf16.mxu0 0
        %2107 = vmatpush1.bf16.msra.mxu0 %v2032
        %2108 = vmatprep.subr.bf16.mxu0 0
        %2109 = vmatpush1.bf16.msra.mxu0 %v2033
        %2110 = vmatprep.subr.bf16.mxu0 0
        %2111 = vmatpush1.bf16.msra.mxu0 %v2034
        %2112 = vmatprep.subr.bf16.mxu0 0
        %2113 = vmatpush1.bf16.msra.mxu0 %v2035
        %2114 = vmatprep.subr.bf16.mxu0 0
        %2115 = vmatpush1.bf16.msra.mxu0 %v2036
        %2116 = vmatprep.subr.bf16.mxu0 0
        %2117 = vmatpush1.bf16.msra.mxu0 %v2037
        %2118 = vmatprep.mubr.bf16.mxu0 %v1820
        %2119 = vmatmul.mubr.bf16.gmra.mrb[0].mxu0 %v1819
        %v2120 = vpop.f32.mrb[0].mxu0
        %v2121 = vadd.f32 %v1892, %v2120
        %v2122 = vpop.f32.mrb[0].mxu0
        %v2123 = vpop.f32.mrb[0].mxu0
        %v2124 = vpop.f32.mrb[0].mxu0
        %2125 = vdwg.mxu0
        %2126 = vmatprep.subr.bf16.mxu0 0
        %2127 = vmatpush1.bf16.msra.mxu0 %v2038
        %2128 = vmatprep.subr.bf16.mxu0 0
        %2129 = vmatpush1.bf16.msra.mxu0 %v2039
        %2130 = vmatprep.subr.bf16.mxu0 0
        %2131 = vmatpush1.bf16.msra.mxu0 %v2040
        %2132 = vmatprep.subr.bf16.mxu0 0
        %2133 = vmatpush1.bf16.msra.mxu0 %v2041
        %2134 = vmatprep.subr.bf16.mxu0 0
        %2135 = vmatpush1.bf16.msra.mxu0 %v2042
        %2136 = vmatprep.subr.bf16.mxu0 0
        %2137 = vmatpush1.bf16.msra.mxu0 %v2043
        %2138 = vmatprep.subr.bf16.mxu0 0
        %2139 = vmatpush1.bf16.msra.mxu0 %v2044
        %2140 = vmatprep.subr.bf16.mxu0 0
        %2141 = vmatpush1.bf16.msra.mxu0 %v2045
        %2142 = vmatprep.subr.bf16.mxu0 0
        %2143 = vmatpush1.bf16.msra.mxu0 %v2046
        %2144 = vmatprep.subr.bf16.mxu0 0
        %2145 = vmatpush1.bf16.msra.mxu0 %v2047
        %2146 = vmatprep.subr.bf16.mxu0 0
        %2147 = vmatpush1.bf16.msra.mxu0 %v2048
        %2148 = vmatprep.subr.bf16.mxu0 0
        %2149 = vmatpush1.bf16.msra.mxu0 %v2049
        %2150 = vmatprep.subr.bf16.mxu0 0
        %2151 = vmatpush1.bf16.msra.mxu0 %v2050
        %2152 = vmatprep.subr.bf16.mxu0 0
        %2153 = vmatpush1.bf16.msra.mxu0 %v2051
        %2154 = vmatprep.subr.bf16.mxu0 0
        %2155 = vmatpush1.bf16.msra.mxu0 %v2052
        %2156 = vmatprep.subr.bf16.mxu0 0
        %2157 = vmatpush1.bf16.msra.mxu0 %v2053
        %2158 = vmatprep.mubr.bf16.mxu0 %v1822
        %2159 = vmatmul.mubr.bf16.gmra.mrb[0].mxu0 %v1821
        %v2160 = vpop.f32.mrb[0].mxu0
        %v2161 = vadd.f32 %v2121, %v2160
        %v2162 = vpop.f32.mrb[0].mxu0
        %v2163 = vpop.f32.mrb[0].mxu0
        %v2164 = vpop.f32.mrb[0].mxu0
        %2165 = vdwg.mxu0
        %v2166 = vpack.c.bf16 %v2161, %v2161
        %2167 = vst [vmem:[%s269] sm:$0xf] %v2166
        %s2168 = sand.u32 %s141, 1
        %s2169 = scalar_lea.sflag [#allocation4], %s2168
        %s2170 = sand.u32 %s141, 1
        %s2171 = smul.addr %s2170, 4
        %s2172 = scalar_lea.vmem [#allocation8], %s2171
        // Predicated region
        $region53: #{tpu_custom_call.1} parent=39 // pred_check
          %p2173 = pneg %p151
        $region54: #{tpu_custom_call.1} parent=39 // pred_check_branch
          %2175 = sbr.rel (%p2173) target = $region56
        $region55: #{tpu_custom_call.1} parent=39 // pred_region
          %s2177 = ssub.s32 64, 64
          %2178 = vsyncadd %s2169, %s2177
          %s2179 = smul.addr %s23, 64
          %s2180 = scalar_lea.hbm %s5, %s2179
          %s2182 = sshll.u32 %s2172, 4
          %s2183 = int_to_ptr.vmem [resolvable:$true] %s2182
          %2185 = dma.vmem_to_hbm [thread:$0]  %s2183, 64, %s2180, %s2169
        $region56: #{tpu_custom_call.1} parent=39 // pred_fallthru
          _
      $region40: #{tpu_custom_call.1} parent=5 // pred_fallthru
        _
      %p2186 = scmp.le.s32.totalorder 2, %s18
      // Predicated region
      $region57: #{tpu_custom_call.1} parent=5 // pred_check
        %p2187 = pneg %p2186
      $region58: #{tpu_custom_call.1} parent=5 // pred_check_branch
        %2189 = sbr.rel (%p2187) target = $region60
      $region59: #{tpu_custom_call.1} parent=5 // pred_region
        %s2190 = ssub.s32 %s18, 2
        // Predicated region
        $region61: #{tpu_custom_call.1} parent=59 // pred_check
          %p2191 = pneg %p157
        $region62: #{tpu_custom_call.1} parent=59 // pred_check_branch
          %2193 = sbr.rel (%p2191) target = $region64
        $region63: #{tpu_custom_call.1} parent=59 // pred_region
          %s2194 = sand.u32 %s142, 1
          %s2195 = scalar_lea.sflag [#allocation4], %s2194
          %s2196 = sand.u32 %s142, 1
          %s2197 = smul.addr %s2196, 4
          %s2198 = scalar_lea.vmem [#allocation8], %s2197
          %2199 = dma.done %s2195, 64
        $region64: #{tpu_custom_call.1} parent=59 // pred_fallthru
          _
      $region60: #{tpu_custom_call.1} parent=5 // pred_fallthru
        _
    $region6: #{tpu_custom_call.1} parent=1 // loop_footer
      %s22 = sadd.s32 1, %s18
    $region7: #{tpu_custom_call.1} parent=1 // loop_footer_branch
      %17 = sbr.rel target = $region3
    $region8: #{tpu_custom_call.1} parent=1 // loop_exit
      _
    %2200 = vsyncpa [#allocation3], 1
    %s2201 = scalar_lea.sflag [#allocation3], 1
    %2202 = vsyncpa %s2201, 1
    %2203 = vsyncpa [#allocation6], 1
    %2204 = vsyncpa [#allocation4], 1
    %s2205 = scalar_lea.sflag [#allocation4], 1
    %2206 = vsyncpa %s2205, 1

</llo_original>
